<compile_context>
chip_gen: v6e
topology: v6e:2x2x1
jax: 0.10.0
libtpu: 0.0.40
codegen_flags: <defaults>
</compile_context>

<pallas_src>
import jax
import jax.numpy as jnp
from jax.experimental import pallas as pl
from jax.experimental.pallas import tpu as pltpu

# ---- module hyper-parameters (from the PyTorch file) ----
LATENT_SIZE = 2
HIDDEN_SIZE_2 = 169
HIDDEN_SIZE_1 = 400
INPUT_SIZE = 784          # decoder output size (e.g. 28*28); ctor arg in the PyTorch module


def _round_up(n, m):
    return ((n + m - 1) // m) * m


# padded (lane-dense) feature widths
H2_PAD = _round_up(HIDDEN_SIZE_2, 128)    # 256
H1_PAD = _round_up(HIDDEN_SIZE_1, 128)    # 512
OUT_PAD = _round_up(INPUT_SIZE, 128)      # 896

DEFAULT_TILE_B = 256                      # batch rows per grid step (multiple of 8)


def decoder2_kernel(x_ref, w1_ref, b1_ref, w2_ref, b2_ref, w3_ref, b3_ref, o_ref):
    """One batch tile of the full forward pass."""
    x = x_ref[...]                                         # (TILE_B, 2) f32

    # Layer 1 (latent=2 -> h2): K=2 matmul is >98% MXU waste, so do it on the VPU
    # as two broadcast FMAs. Padded h2 lanes see w1 = b1 = 0 -> stay exactly 0.
    h = (x[:, 0:1] * w1_ref[0:1, :]
         + x[:, 1:2] * w1_ref[1:2, :]
         + b1_ref[...])
    h = jnp.maximum(h, 0.0)                                # (TILE_B, H2_PAD) f32

    # Layer 2 (h2 -> h1): bf16 operands, f32 accumulation on the MXU.
    h = jnp.dot(h.astype(jnp.bfloat16), w2_ref[...],
                preferred_element_type=jnp.float32) + b2_ref[...]
    h = jnp.maximum(h, 0.0)                                # (TILE_B, H1_PAD) f32

    # Layer 3 (h1 -> input): bf16 operands, f32 accumulation, no activation.
    y = jnp.dot(h.astype(jnp.bfloat16), w3_ref[...],
                preferred_element_type=jnp.float32) + b3_ref[...]
    o_ref[...] = y.astype(o_ref.dtype)                     # (TILE_B, OUT_PAD)


def decoder2_forward(x, kernel_params, *, tile_b=DEFAULT_TILE_B):
    """x: (B, LATENT_SIZE) float32. kernel_params: padded/bf16 params from prepare_params()."""
    B = x.shape[0]
    # Don't make the tile bigger than the (8-aligned) batch itself.
    tile_b = min(tile_b, max(8, _round_up(B, 8)))
    b_pad = _round_up(B, tile_b)
    if b_pad != B:
        x = jnp.pad(x, ((0, b_pad - B), (0, 0)))

    const2d = lambda i: (0, 0)        # weights/biases: same block every step -> DMA'd once
    row_map = lambda i: (i, 0)        # x / out: tiled along batch

    y_pad = pl.pallas_call(
        decoder2_kernel,
        out_shape=jax.ShapeDtypeStruct((b_pad, OUT_PAD), jnp.float32),
        grid=(b_pad // tile_b,),
        in_specs=[
            pl.BlockSpec((tile_b, LATENT_SIZE), row_map),   # x
            pl.BlockSpec((LATENT_SIZE, H2_PAD), const2d),   # w1 (f32)
            pl.BlockSpec((1, H2_PAD), const2d),             # b1 (f32)
            pl.BlockSpec((H2_PAD, H1_PAD), const2d),        # w2 (bf16)
            pl.BlockSpec((1, H1_PAD), const2d),             # b2 (f32)
            pl.BlockSpec((H1_PAD, OUT_PAD), const2d),       # w3 (bf16)
            pl.BlockSpec((1, OUT_PAD), const2d),            # b3 (f32)
        ],
        out_specs=pl.BlockSpec((tile_b, OUT_PAD), row_map),
        compiler_params=pltpu.CompilerParams(
            dimension_semantics=("parallel",),              # v7x: shard batch across both TCs
        ),
    )(x, kernel_params["w1"], kernel_params["b1"],
      kernel_params["w2"], kernel_params["b2"],
      kernel_params["w3"], kernel_params["b3"])

    # Drop batch padding and the padded output lanes (896 -> 784).
    return y_pad[:B, :INPUT_SIZE]


def init_params(key):
    """Logical (unpadded, f32) params mimicking torch.nn.Linear default init.

    Weights stored as (in_features, out_features) (i.e. transposed vs torch);
    biases as (1, out_features).
    """
    def linear_init(k, fan_in, fan_out):
        kw, kb = jax.random.split(k)
        bound = 1.0 / jnp.sqrt(float(fan_in))
        w = jax.random.uniform(kw, (fan_in, fan_out), jnp.float32, -bound, bound)
        b = jax.random.uniform(kb, (1, fan_out), jnp.float32, -bound, bound)
        return w, b

    k1, k2, k3 = jax.random.split(key, 3)
    w1, b1 = linear_init(k1, LATENT_SIZE, HIDDEN_SIZE_2)
    w2, b2 = linear_init(k2, HIDDEN_SIZE_2, HIDDEN_SIZE_1)
    w3, b3 = linear_init(k3, HIDDEN_SIZE_1, INPUT_SIZE)
    return {"w1": w1, "b1": b1, "w2": w2, "b2": b2, "w3": w3, "b3": b3}


def prepare_params(params):
    """Zero-pad feature dims to 128-multiples and cast MXU weights to bf16 (kept device-resident)."""
    w1 = jnp.pad(params["w1"], ((0, 0), (0, H2_PAD - HIDDEN_SIZE_2)))
    b1 = jnp.pad(params["b1"], ((0, 0), (0, H2_PAD - HIDDEN_SIZE_2)))
    w2 = jnp.pad(params["w2"], ((0, H2_PAD - HIDDEN_SIZE_2),
                                (0, H1_PAD - HIDDEN_SIZE_1))).astype(jnp.bfloat16)
    b2 = jnp.pad(params["b2"], ((0, 0), (0, H1_PAD - HIDDEN_SIZE_1)))
    w3 = jnp.pad(params["w3"], ((0, H1_PAD - HIDDEN_SIZE_1),
                                (0, OUT_PAD - INPUT_SIZE))).astype(jnp.bfloat16)
    b3 = jnp.pad(params["b3"], ((0, 0), (0, OUT_PAD - INPUT_SIZE)))
    return {"w1": w1, "b1": b1, "w2": w2, "b2": b2, "w3": w3, "b3": b3}


def decoder2_reference_f32(x, params):
    """Pure-JAX f32 reference of the original module semantics."""
    h = jnp.maximum(x @ params["w1"] + params["b1"], 0.0)
    h = jnp.maximum(h @ params["w2"] + params["b2"], 0.0)
    return h @ params["w3"] + params["b3"]


def decoder2_reference_bf16(x, params):
    """Pure-JAX reference matching the kernel's bf16-weight / f32-accumulate numerics."""
    h = jnp.maximum(x @ params["w1"] + params["b1"], 0.0)
    h = jnp.dot(h.astype(jnp.bfloat16), params["w2"].astype(jnp.bfloat16),
                preferred_element_type=jnp.float32) + params["b2"]
    h = jnp.maximum(h, 0.0)
    return jnp.dot(h.astype(jnp.bfloat16), params["w3"].astype(jnp.bfloat16),
                   preferred_element_type=jnp.float32) + params["b3"]


if __name__ == "__main__":
    key = jax.random.PRNGKey(0)
    kx, kp = jax.random.split(key)

    B = 8  # small batch for the test; the kernel tiles larger batches automatically
    x = jax.random.normal(kx, (B, LATENT_SIZE), jnp.float32)

    params = init_params(kp)                  # logical f32 params (reference)
    kernel_params = prepare_params(params)    # padded / bf16 params (kernel)

    out = decoder2_forward(x, kernel_params)
    out = jax.block_until_ready(out)
    assert out.shape == (B, INPUT_SIZE)

    # Exact-ish check against a reference using the same bf16 weights / f32 accumulation.
    ref_bf16 = decoder2_reference_bf16(x, params)
    assert jnp.allclose(out, ref_bf16, atol=2e-3, rtol=2e-3), "mismatch vs. bf16 JAX reference"

    # Looser sanity check against the full-f32 module semantics (bf16 rounding bound).
    ref_f32 = decoder2_reference_f32(x, params)
    assert jnp.allclose(out, ref_f32, atol=3e-2, rtol=3e-2), "mismatch vs. f32 JAX reference"

    print("KERNEL_OK")
</pallas_src>

<mosaic_0001>
module attributes {stable_mosaic.version = 11 : i64} {
  func.func @decoder2_kernel(%arg0: i32, %arg1: memref<8x2xf32, #tpu.memory_space<vmem>>, %arg2: memref<2x256xf32, #tpu.memory_space<vmem>>, %arg3: memref<1x256xf32, #tpu.memory_space<vmem>>, %arg4: memref<256x512xbf16, #tpu.memory_space<vmem>>, %arg5: memref<1x512xf32, #tpu.memory_space<vmem>>, %arg6: memref<512x896xbf16, #tpu.memory_space<vmem>>, %arg7: memref<1x896xf32, #tpu.memory_space<vmem>>, %arg8: memref<8x896xf32, #tpu.memory_space<vmem>>) attributes {dimension_semantics = [#tpu.dimension_semantics<parallel>], iteration_bounds = array<i64: 1>, scalar_prefetch = 0 : i64, scratch_operands = 0 : i64, tpu.core_type = #tpu.core_type<tc>, window_params = [{transform_indices = @transform_0, window_bounds = array<i64: 8, 2>}, {pipeline_mode = #tpu.pipeline_mode<synchronous>, transform_indices = @transform_1, window_bounds = array<i64: 2, 256>}, {pipeline_mode = #tpu.pipeline_mode<synchronous>, transform_indices = @transform_2, window_bounds = array<i64: 1, 256>}, {pipeline_mode = #tpu.pipeline_mode<synchronous>, transform_indices = @transform_3, window_bounds = array<i64: 256, 512>}, {pipeline_mode = #tpu.pipeline_mode<synchronous>, transform_indices = @transform_4, window_bounds = array<i64: 1, 512>}, {pipeline_mode = #tpu.pipeline_mode<synchronous>, transform_indices = @transform_5, window_bounds = array<i64: 512, 896>}, {pipeline_mode = #tpu.pipeline_mode<synchronous>, transform_indices = @transform_6, window_bounds = array<i64: 1, 896>}, {transform_indices = @transform_7, window_bounds = array<i64: 8, 896>}]} {
    %c0 = arith.constant 0 : index
    %c0_0 = arith.constant 0 : index
    %0 = vector.load %arg1[%c0, %c0_0] : memref<8x2xf32, #tpu.memory_space<vmem>>, vector<8x2xf32>
    %1 = vector.extract_strided_slice %0 {offsets = [0, 0], sizes = [8, 1], strides = [1, 1]} : vector<8x2xf32> to vector<8x1xf32>
    %c0_1 = arith.constant 0 : index
    %c0_2 = arith.constant 0 : index
    %2 = vector.load %arg2[%c0_1, %c0_2] : memref<2x256xf32, #tpu.memory_space<vmem>>, vector<1x256xf32>
    %3 = vector.broadcast %1 : vector<8x1xf32> to vector<8x256xf32>
    %4 = vector.broadcast %2 : vector<1x256xf32> to vector<8x256xf32>
    %5 = arith.mulf %3, %4 : vector<8x256xf32>
    %6 = vector.extract_strided_slice %0 {offsets = [0, 1], sizes = [8, 1], strides = [1, 1]} : vector<8x2xf32> to vector<8x1xf32>
    %c1 = arith.constant 1 : index
    %c0_3 = arith.constant 0 : index
    %7 = vector.load %arg2[%c1, %c0_3] : memref<2x256xf32, #tpu.memory_space<vmem>>, vector<1x256xf32>
    %8 = vector.broadcast %6 : vector<8x1xf32> to vector<8x256xf32>
    %9 = vector.broadcast %7 : vector<1x256xf32> to vector<8x256xf32>
    %10 = arith.mulf %8, %9 : vector<8x256xf32>
    %11 = arith.addf %5, %10 : vector<8x256xf32>
    %c0_4 = arith.constant 0 : index
    %c0_5 = arith.constant 0 : index
    %12 = vector.load %arg3[%c0_4, %c0_5] : memref<1x256xf32, #tpu.memory_space<vmem>>, vector<1x256xf32>
    %13 = vector.broadcast %12 : vector<1x256xf32> to vector<8x256xf32>
    %14 = arith.addf %11, %13 : vector<8x256xf32>
    %cst = arith.constant 0.000000e+00 : f32
    %15 = vector.broadcast %cst : f32 to vector<8x256xf32>
    %16 = arith.maximumf %14, %15 : vector<8x256xf32>
    %17 = arith.truncf %16 : vector<8x256xf32> to vector<8x256xbf16>
    %c0_6 = arith.constant 0 : index
    %c0_7 = arith.constant 0 : index
    %18 = vector.load %arg4[%c0_6, %c0_7] : memref<256x512xbf16, #tpu.memory_space<vmem>>, vector<256x512xbf16>
    %cst_8 = arith.constant dense<0.000000e+00> : vector<8x512xf32>
    %19 = tpu.matmul %17, %18, %cst_8 {dimension_numbers = #tpu.dot_dimension_numbers<[1], [0], [0], [1], [0, 0, 1, 1], [], []>} : vector<8x256xbf16>, vector<256x512xbf16>, vector<8x512xf32> -> vector<8x512xf32>
    %c0_9 = arith.constant 0 : index
    %c0_10 = arith.constant 0 : index
    %20 = vector.load %arg5[%c0_9, %c0_10] : memref<1x512xf32, #tpu.memory_space<vmem>>, vector<1x512xf32>
    %21 = vector.broadcast %20 : vector<1x512xf32> to vector<8x512xf32>
    %22 = arith.addf %19, %21 : vector<8x512xf32>
    %cst_11 = arith.constant 0.000000e+00 : f32
    %23 = vector.broadcast %cst_11 : f32 to vector<8x512xf32>
    %24 = arith.maximumf %22, %23 : vector<8x512xf32>
    %25 = arith.truncf %24 : vector<8x512xf32> to vector<8x512xbf16>
    %c0_12 = arith.constant 0 : index
    %c0_13 = arith.constant 0 : index
    %26 = vector.load %arg6[%c0_12, %c0_13] : memref<512x896xbf16, #tpu.memory_space<vmem>>, vector<512x896xbf16>
    %cst_14 = arith.constant dense<0.000000e+00> : vector<8x896xf32>
    %27 = tpu.matmul %25, %26, %cst_14 {dimension_numbers = #tpu.dot_dimension_numbers<[1], [0], [0], [1], [0, 0, 1, 1], [], []>} : vector<8x512xbf16>, vector<512x896xbf16>, vector<8x896xf32> -> vector<8x896xf32>
    %c0_15 = arith.constant 0 : index
    %c0_16 = arith.constant 0 : index
    %28 = vector.load %arg7[%c0_15, %c0_16] : memref<1x896xf32, #tpu.memory_space<vmem>>, vector<1x896xf32>
    %29 = vector.broadcast %28 : vector<1x896xf32> to vector<8x896xf32>
    %30 = arith.addf %27, %29 : vector<8x896xf32>
    %c0_17 = arith.constant 0 : index
    %c0_18 = arith.constant 0 : index
    %31 = vector.load %arg8[%c0_17, %c0_18] : memref<8x896xf32, #tpu.memory_space<vmem>>, vector<8x896xf32>
    tpu.vector_store %arg8[%c0_17, %c0_18], %30 {strides = array<i32>} : memref<8x896xf32, #tpu.memory_space<vmem>>, vector<8x896xf32>,
    return
  }
  func.func @transform_0(%arg0: i32) -> (i32, i32) {
    %c0_i32 = arith.constant 0 : i32
    %c0_i32_0 = arith.constant 0 : i32
    return %arg0, %c0_i32 : i32, i32
  }
  func.func @transform_1(%arg0: i32) -> (i32, i32) {
    %c0_i32 = arith.constant 0 : i32
    %c0_i32_0 = arith.constant 0 : i32
    %c0_i32_1 = arith.constant 0 : i32
    return %c0_i32, %c0_i32_0 : i32, i32
  }
  func.func @transform_2(%arg0: i32) -> (i32, i32) {
    %c0_i32 = arith.constant 0 : i32
    %c0_i32_0 = arith.constant 0 : i32
    %c0_i32_1 = arith.constant 0 : i32
    return %c0_i32, %c0_i32_0 : i32, i32
  }
  func.func @transform_3(%arg0: i32) -> (i32, i32) {
    %c0_i32 = arith.constant 0 : i32
    %c0_i32_0 = arith.constant 0 : i32
    %c0_i32_1 = arith.constant 0 : i32
    return %c0_i32, %c0_i32_0 : i32, i32
  }
  func.func @transform_4(%arg0: i32) -> (i32, i32) {
    %c0_i32 = arith.constant 0 : i32
    %c0_i32_0 = arith.constant 0 : i32
    %c0_i32_1 = arith.constant 0 : i32
    return %c0_i32, %c0_i32_0 : i32, i32
  }
  func.func @transform_5(%arg0: i32) -> (i32, i32) {
    %c0_i32 = arith.constant 0 : i32
    %c0_i32_0 = arith.constant 0 : i32
    %c0_i32_1 = arith.constant 0 : i32
    return %c0_i32, %c0_i32_0 : i32, i32
  }
  func.func @transform_6(%arg0: i32) -> (i32, i32) {
    %c0_i32 = arith.constant 0 : i32
    %c0_i32_0 = arith.constant 0 : i32
    %c0_i32_1 = arith.constant 0 : i32
    return %c0_i32, %c0_i32_0 : i32, i32
  }
  func.func @transform_7(%arg0: i32) -> (i32, i32) {
    %c0_i32 = arith.constant 0 : i32
    %c0_i32_0 = arith.constant 0 : i32
    return %arg0, %c0_i32 : i32, i32
  }
}

</mosaic_0001>

<llo_original>
// kernel: tpu_custom_call.1
$region0: #{tpu_custom_call.1}
  #allocation0 [shape = 'u32[]', space=smem, size = 0x4, offset = 0x4, fixed_abs, tag = 'smem constant byte address 0x4 - core index']
  #allocation1 [shape = 'u32[144,128]{1,0:T(1,128)}', space=vmem, size = 0x12000, scoped, tag = 'internal scratch']
  %s0 = inlined_call_operand.vmem [shape: f32[8,2], index: 0, kind: input, shape index: {}]
  %s1 = inlined_call_operand.vmem [shape: f32[2,256], index: 1, kind: input, shape index: {}]
  %s2 = inlined_call_operand.hbm [shape: f32[1,256], index: 2, kind: input, shape index: {}]
  %s3 = inlined_call_operand.hbm [shape: bf16[256,512], index: 3, kind: input, shape index: {}]
  %s4 = inlined_call_operand.vmem [shape: f32[1,512], index: 4, kind: input, shape index: {}]
  %s5 = inlined_call_operand.hbm [shape: bf16[512,896], index: 5, kind: input, shape index: {}]
  %s6 = inlined_call_operand.vmem [shape: f32[1,896], index: 6, kind: input, shape index: {}]
  %s7 = inlined_call_operand.hbm [shape: f32[8,896], index: 7, kind: output, shape index: {}]
  %s8 = sld [smem:[#allocation0]]
  $region50: #{tpu_custom_call.1} parent=0
    _
  %s10 = ssub.s32 1, %s8
  %s11 = scalar_select 0, %s10, %s8
  $region1: #{tpu_custom_call.1} parent=0
    #allocation2 [shape = 'u8[1024]{0}', space=vmem, size = 0x400, scoped, tag = 'input window, operand 2, single buffered']
    #allocation3 [shape = 's32[1]{0}', space=sflag, size = 0x4, scoped, tag = 'scoped memory for tpu_custom_call.1']
    #allocation4 [shape = 's32[1]{0}', space=sflag, size = 0x4, scoped, tag = 'scoped memory for tpu_custom_call.1']
    #allocation5 [shape = 'u8[262144]{0}', space=vmem, size = 0x40000, scoped, tag = 'input window, operand 3, single buffered']
    #allocation6 [shape = 's32[1]{0}', space=sflag, size = 0x4, scoped, tag = 'scoped memory for tpu_custom_call.1']
    #allocation7 [shape = 'u8[917504]{0}', space=vmem, size = 0xe0000, scoped, tag = 'input window, operand 5, single buffered']
    #allocation8 [shape = 'u8[28672]{0}', space=vmem, size = 0x7000, scoped, tag = 'output window, operand 0, single buffered']
    %12 = vsyncpa [#allocation3], 0
    %13 = vsyncpa [#allocation6], 0
    %14 = vsyncpa [#allocation4], 0
    // Predicated region
    $region2: #{tpu_custom_call.1} parent=1 // pred_check
      _
    $region3: #{tpu_custom_call.1} parent=1 // pred_check_branch
      %16 = sbr.rel (0) target = $region5
    $region4: #{tpu_custom_call.1} parent=1 // pred_region
      _
    $region5: #{tpu_custom_call.1} parent=1 // pred_fallthru
      _
    // Predicated region
    $region6: #{tpu_custom_call.1} parent=1 // pred_check
      _
    $region7: #{tpu_custom_call.1} parent=1 // pred_check_branch
      %18 = sbr.rel (0) target = $region9
    $region8: #{tpu_custom_call.1} parent=1 // pred_region
      _
    $region9: #{tpu_custom_call.1} parent=1 // pred_fallthru
      _
    // Predicated region
    $region10: #{tpu_custom_call.1} parent=1 // pred_check
      _
    $region11: #{tpu_custom_call.1} parent=1 // pred_check_branch
      %20 = sbr.rel (0) target = $region13
    $region12: #{tpu_custom_call.1} parent=1 // pred_region
      %s22 = ssub.s32 32, 32
      %23 = vsyncadd [#allocation3], %s22
      %s25 = sshll.u32 [#allocation2], 4
      %s26 = int_to_ptr.vmem [resolvable:$true] %s25
      %28 = dma.hbm_to_vmem [thread:$0]  %s2, 32, %s26, [#allocation3]
    $region13: #{tpu_custom_call.1} parent=1 // pred_fallthru
      _
    // Predicated region
    $region14: #{tpu_custom_call.1} parent=1 // pred_check
      _
    $region15: #{tpu_custom_call.1} parent=1 // pred_check_branch
      %30 = sbr.rel (0) target = $region17
    $region16: #{tpu_custom_call.1} parent=1 // pred_region
      %s32 = ssub.s32 8192, 8192
      %33 = vsyncadd [#allocation6], %s32
      %s34 = sshll.u32 [#allocation5], 4
      %s35 = int_to_ptr.vmem [resolvable:$true] %s34
      %40 = dma.hbm_to_vmem [thread:$0]  %s3, 8192, %s35, [#allocation6], 256, 256, 16
    $region17: #{tpu_custom_call.1} parent=1 // pred_fallthru
      _
    // Predicated region
    $region18: #{tpu_custom_call.1} parent=1 // pred_check
      _
    $region19: #{tpu_custom_call.1} parent=1 // pred_check_branch
      %42 = sbr.rel (0) target = $region21
    $region20: #{tpu_custom_call.1} parent=1 // pred_region
      _
    $region21: #{tpu_custom_call.1} parent=1 // pred_fallthru
      _
    // Predicated region
    $region22: #{tpu_custom_call.1} parent=1 // pred_check
      _
    $region23: #{tpu_custom_call.1} parent=1 // pred_check_branch
      %44 = sbr.rel (0) target = $region25
    $region24: #{tpu_custom_call.1} parent=1 // pred_region
      %s46 = ssub.s32 28672, 28672
      %47 = vsyncadd [#allocation6], %s46
      %s48 = sshll.u32 [#allocation7], 4
      %s49 = int_to_ptr.vmem [resolvable:$true] %s48
      %54 = dma.hbm_to_vmem [thread:$0]  %s5, 28672, %s49, [#allocation6], 448, 448, 28
    $region25: #{tpu_custom_call.1} parent=1 // pred_fallthru
      _
    // Predicated region
    $region26: #{tpu_custom_call.1} parent=1 // pred_check
      _
    $region27: #{tpu_custom_call.1} parent=1 // pred_check_branch
      %56 = sbr.rel (0) target = $region29
    $region28: #{tpu_custom_call.1} parent=1 // pred_region
      _
    $region29: #{tpu_custom_call.1} parent=1 // pred_fallthru
      _
    // Predicated region
    $region30: #{tpu_custom_call.1} parent=1 // pred_check
      _
    $region31: #{tpu_custom_call.1} parent=1 // pred_check_branch
      %58 = sbr.rel (0) target = $region33
    $region32: #{tpu_custom_call.1} parent=1 // pred_region
      %59 = dma.done [#allocation3], 32
    $region33: #{tpu_custom_call.1} parent=1 // pred_fallthru
      _
    // Predicated region
    $region34: #{tpu_custom_call.1} parent=1 // pred_check
      _
    $region35: #{tpu_custom_call.1} parent=1 // pred_check_branch
      %61 = sbr.rel (0) target = $region37
    $region36: #{tpu_custom_call.1} parent=1 // pred_region
      %62 = dma.done [#allocation6], 8192
    $region37: #{tpu_custom_call.1} parent=1 // pred_fallthru
      _
    // Predicated region
    $region38: #{tpu_custom_call.1} parent=1 // pred_check
      _
    $region39: #{tpu_custom_call.1} parent=1 // pred_check_branch
      %64 = sbr.rel (0) target = $region41
    $region40: #{tpu_custom_call.1} parent=1 // pred_region
      %65 = dma.done [#allocation6], 28672
    $region41: #{tpu_custom_call.1} parent=1 // pred_fallthru
      _
    %v67 = vld [vmem:[%s0] sm:$0xff]
    %v68 = vld [vmem:[%s1] ss:$2 sm:$0x3]
    %70 = vset.pattern.permute.xlu0 0
    %71 = vperm.xlu0 %70, %v67
    %v72 = vpop.permute.xlu0 %71
    %v75 = vlaneseq
    %v76 = vshrl.u32 %v75, 7
    %v77 = vsub.s32 0, %v76
    %v78 = vrot.slane %v68, %v77
    %v79 = vlaneseq
    %v80 = vshrl.u32 %v79, 7
    %v81 = vsub.s32 1, %v80
    %v82 = vrot.slane %v68, %v81
    %v85 = vmul.f32 %v72, %v78
    %v86 = vmul.f32 %v72, %v82
    %s87 = scalar_lea.vmem %s1, 1
    %v88 = vld [vmem:[%s87] ss:$2 sm:$0x3]
    %89 = vset.pattern.permute.xlu0 1
    %90 = vperm.xlu0 %89, %v67
    %v91 = vpop.permute.xlu0 %90
    %v94 = vlaneseq
    %v95 = vshrl.u32 %v94, 7
    %v96 = vsub.s32 0, %v95
    %v97 = vrot.slane %v88, %v96
    %v98 = vlaneseq
    %v99 = vshrl.u32 %v98, 7
    %v100 = vsub.s32 1, %v99
    %v101 = vrot.slane %v88, %v100
    %v104 = vmul.f32 %v91, %v97
    %v105 = vmul.f32 %v91, %v101
    %v106 = vadd.f32 %v85, %v104
    %v107 = vadd.f32 %v86, %v105
    %v108 = vld [vmem:[#allocation2] sm:$0x3]
    %v110 = vlaneseq
    %v111 = vshrl.u32 %v110, 7
    %v112 = vsub.s32 0, %v111
    %v113 = vrot.slane %v108, %v112
    %v114 = vlaneseq
    %v115 = vshrl.u32 %v114, 7
    %v116 = vsub.s32 1, %v115
    %v117 = vrot.slane %v108, %v116
    %v120 = vadd.f32 %v106, %v113
    %v121 = vadd.f32 %v107, %v117
    %v122 = vmax.f32 %v120, 0.0
    %v123 = vmax.f32 %v121, 0.0
    %v124 = vpack.c.bf16 %v122, %v122
    %v125 = vpack.c.bf16 %v123, %v123
    %v126 = vld [vmem:[#allocation5] sm:$0xff]
    %v127 = vld [vmem:[#allocation5 + $0x8] sm:$0xff]
    %v128 = vld [vmem:[#allocation5 + $0x10] sm:$0xff]
    %v129 = vld [vmem:[#allocation5 + $0x18] sm:$0xff]
    %v130 = vld [vmem:[#allocation5 + $0x20] sm:$0xff]
    %v131 = vld [vmem:[#allocation5 + $0x28] sm:$0xff]
    %v132 = vld [vmem:[#allocation5 + $0x30] sm:$0xff]
    %v133 = vld [vmem:[#allocation5 + $0x38] sm:$0xff]
    %v134 = vld [vmem:[#allocation5 + $0x40] sm:$0xff]
    %v135 = vld [vmem:[#allocation5 + $0x48] sm:$0xff]
    %v136 = vld [vmem:[#allocation5 + $0x50] sm:$0xff]
    %v137 = vld [vmem:[#allocation5 + $0x58] sm:$0xff]
    %v138 = vld [vmem:[#allocation5 + $0x60] sm:$0xff]
    %v139 = vld [vmem:[#allocation5 + $0x68] sm:$0xff]
    %v140 = vld [vmem:[#allocation5 + $0x70] sm:$0xff]
    %v141 = vld [vmem:[#allocation5 + $0x78] sm:$0xff]
    %v142 = vld [vmem:[#allocation5 + $0x80] sm:$0xff]
    %v143 = vld [vmem:[#allocation5 + $0x88] sm:$0xff]
    %v144 = vld [vmem:[#allocation5 + $0x90] sm:$0xff]
    %v145 = vld [vmem:[#allocation5 + $0x98] sm:$0xff]
    %v146 = vld [vmem:[#allocation5 + $0xa0] sm:$0xff]
    %v147 = vld [vmem:[#allocation5 + $0xa8] sm:$0xff]
    %v148 = vld [vmem:[#allocation5 + $0xb0] sm:$0xff]
    %v149 = vld [vmem:[#allocation5 + $0xb8] sm:$0xff]
    %v150 = vld [vmem:[#allocation5 + $0xc0] sm:$0xff]
    %v151 = vld [vmem:[#allocation5 + $0xc8] sm:$0xff]
    %v152 = vld [vmem:[#allocation5 + $0xd0] sm:$0xff]
    %v153 = vld [vmem:[#allocation5 + $0xd8] sm:$0xff]
    %v154 = vld [vmem:[#allocation5 + $0xe0] sm:$0xff]
    %v155 = vld [vmem:[#allocation5 + $0xe8] sm:$0xff]
    %v156 = vld [vmem:[#allocation5 + $0xf0] sm:$0xff]
    %v157 = vld [vmem:[#allocation5 + $0xf8] sm:$0xff]
    %v158 = vld [vmem:[#allocation5 + $0x100] sm:$0xff]
    %v159 = vld [vmem:[#allocation5 + $0x108] sm:$0xff]
    %v160 = vld [vmem:[#allocation5 + $0x110] sm:$0xff]
    %v161 = vld [vmem:[#allocation5 + $0x118] sm:$0xff]
    %v162 = vld [vmem:[#allocation5 + $0x120] sm:$0xff]
    %v163 = vld [vmem:[#allocation5 + $0x128] sm:$0xff]
    %v164 = vld [vmem:[#allocation5 + $0x130] sm:$0xff]
    %v165 = vld [vmem:[#allocation5 + $0x138] sm:$0xff]
    %v166 = vld [vmem:[#allocation5 + $0x140] sm:$0xff]
    %v167 = vld [vmem:[#allocation5 + $0x148] sm:$0xff]
    %v168 = vld [vmem:[#allocation5 + $0x150] sm:$0xff]
    %v169 = vld [vmem:[#allocation5 + $0x158] sm:$0xff]
    %v170 = vld [vmem:[#allocation5 + $0x160] sm:$0xff]
    %v171 = vld [vmem:[#allocation5 + $0x168] sm:$0xff]
    %v172 = vld [vmem:[#allocation5 + $0x170] sm:$0xff]
    %v173 = vld [vmem:[#allocation5 + $0x178] sm:$0xff]
    %v174 = vld [vmem:[#allocation5 + $0x180] sm:$0xff]
    %v175 = vld [vmem:[#allocation5 + $0x188] sm:$0xff]
    %v176 = vld [vmem:[#allocation5 + $0x190] sm:$0xff]
    %v177 = vld [vmem:[#allocation5 + $0x198] sm:$0xff]
    %v178 = vld [vmem:[#allocation5 + $0x1a0] sm:$0xff]
    %v179 = vld [vmem:[#allocation5 + $0x1a8] sm:$0xff]
    %v180 = vld [vmem:[#allocation5 + $0x1b0] sm:$0xff]
    %v181 = vld [vmem:[#allocation5 + $0x1b8] sm:$0xff]
    %v182 = vld [vmem:[#allocation5 + $0x1c0] sm:$0xff]
    %v183 = vld [vmem:[#allocation5 + $0x1c8] sm:$0xff]
    %v184 = vld [vmem:[#allocation5 + $0x1d0] sm:$0xff]
    %v185 = vld [vmem:[#allocation5 + $0x1d8] sm:$0xff]
    %v186 = vld [vmem:[#allocation5 + $0x1e0] sm:$0xff]
    %v187 = vld [vmem:[#allocation5 + $0x1e8] sm:$0xff]
    %v188 = vld [vmem:[#allocation5 + $0x1f0] sm:$0xff]
    %v189 = vld [vmem:[#allocation5 + $0x1f8] sm:$0xff]
    %v190 = vld [vmem:[%s4] sm:$0xf]
    %v192 = vlaneseq
    %v193 = vshrl.u32 %v192, 7
    %v194 = vsub.s32 0, %v193
    %v195 = vrot.slane %v190, %v194
    %v196 = vlaneseq
    %v197 = vshrl.u32 %v196, 7
    %v198 = vsub.s32 1, %v197
    %v199 = vrot.slane %v190, %v198
    %v200 = vlaneseq
    %v201 = vshrl.u32 %v200, 7
    %v202 = vsub.s32 2, %v201
    %v203 = vrot.slane %v190, %v202
    %v204 = vlaneseq
    %v205 = vshrl.u32 %v204, 7
    %v206 = vsub.s32 3, %v205
    %v207 = vrot.slane %v190, %v206
    %v276 = vunpack.c.l.b16 %v126
    %v277 = vunpack.c.h.b16 %v126
    %v278 = vunpack.c.l.b16 %v127
    %v279 = vunpack.c.h.b16 %v127
    %v280 = vunpack.c.l.b16 %v128
    %v281 = vunpack.c.h.b16 %v128
    %v282 = vunpack.c.l.b16 %v129
    %v283 = vunpack.c.h.b16 %v129
    %v284 = vunpack.c.l.b16 %v130
    %v285 = vunpack.c.h.b16 %v130
    %v286 = vunpack.c.l.b16 %v131
    %v287 = vunpack.c.h.b16 %v131
    %v288 = vunpack.c.l.b16 %v132
    %v289 = vunpack.c.h.b16 %v132
    %v290 = vunpack.c.l.b16 %v133
    %v291 = vunpack.c.h.b16 %v133
    %v292 = vunpack.c.l.b16 %v134
    %v293 = vunpack.c.h.b16 %v134
    %v294 = vunpack.c.l.b16 %v135
    %v295 = vunpack.c.h.b16 %v135
    %v296 = vunpack.c.l.b16 %v136
    %v297 = vunpack.c.h.b16 %v136
    %v298 = vunpack.c.l.b16 %v137
    %v299 = vunpack.c.h.b16 %v137
    %v300 = vunpack.c.l.b16 %v138
    %v301 = vunpack.c.h.b16 %v138
    %v302 = vunpack.c.l.b16 %v139
    %v303 = vunpack.c.h.b16 %v139
    %v304 = vunpack.c.l.b16 %v140
    %v305 = vunpack.c.h.b16 %v140
    %v306 = vunpack.c.l.b16 %v141
    %v307 = vunpack.c.h.b16 %v141
    %v308 = vunpack.c.l.b16 %v142
    %v309 = vunpack.c.h.b16 %v142
    %v310 = vunpack.c.l.b16 %v143
    %v311 = vunpack.c.h.b16 %v143
    %v312 = vunpack.c.l.b16 %v144
    %v313 = vunpack.c.h.b16 %v144
    %v314 = vunpack.c.l.b16 %v145
    %v315 = vunpack.c.h.b16 %v145
    %v316 = vunpack.c.l.b16 %v146
    %v317 = vunpack.c.h.b16 %v146
    %v318 = vunpack.c.l.b16 %v147
    %v319 = vunpack.c.h.b16 %v147
    %v320 = vunpack.c.l.b16 %v148
    %v321 = vunpack.c.h.b16 %v148
    %v322 = vunpack.c.l.b16 %v149
    %v323 = vunpack.c.h.b16 %v149
    %v324 = vunpack.c.l.b16 %v150
    %v325 = vunpack.c.h.b16 %v150
    %v326 = vunpack.c.l.b16 %v151
    %v327 = vunpack.c.h.b16 %v151
    %v328 = vunpack.c.l.b16 %v152
    %v329 = vunpack.c.h.b16 %v152
    %v330 = vunpack.c.l.b16 %v153
    %v331 = vunpack.c.h.b16 %v153
    %v332 = vunpack.c.l.b16 %v154
    %v333 = vunpack.c.h.b16 %v154
    %v334 = vunpack.c.l.b16 %v155
    %v335 = vunpack.c.h.b16 %v155
    %v336 = vunpack.c.l.b16 %v156
    %v337 = vunpack.c.h.b16 %v156
    %v338 = vunpack.c.l.b16 %v157
    %v339 = vunpack.c.h.b16 %v157
    %v340 = vunpack.c.l.b16 %v158
    %v341 = vunpack.c.h.b16 %v158
    %v342 = vunpack.c.l.b16 %v159
    %v343 = vunpack.c.h.b16 %v159
    %v344 = vunpack.c.l.b16 %v160
    %v345 = vunpack.c.h.b16 %v160
    %v346 = vunpack.c.l.b16 %v161
    %v347 = vunpack.c.h.b16 %v161
    %v348 = vunpack.c.l.b16 %v162
    %v349 = vunpack.c.h.b16 %v162
    %v350 = vunpack.c.l.b16 %v163
    %v351 = vunpack.c.h.b16 %v163
    %v352 = vunpack.c.l.b16 %v164
    %v353 = vunpack.c.h.b16 %v164
    %v354 = vunpack.c.l.b16 %v165
    %v355 = vunpack.c.h.b16 %v165
    %v356 = vunpack.c.l.b16 %v166
    %v357 = vunpack.c.h.b16 %v166
    %v358 = vunpack.c.l.b16 %v167
    %v359 = vunpack.c.h.b16 %v167
    %v360 = vunpack.c.l.b16 %v168
    %v361 = vunpack.c.h.b16 %v168
    %v362 = vunpack.c.l.b16 %v169
    %v363 = vunpack.c.h.b16 %v169
    %v364 = vunpack.c.l.b16 %v170
    %v365 = vunpack.c.h.b16 %v170
    %v366 = vunpack.c.l.b16 %v171
    %v367 = vunpack.c.h.b16 %v171
    %v368 = vunpack.c.l.b16 %v172
    %v369 = vunpack.c.h.b16 %v172
    %v370 = vunpack.c.l.b16 %v173
    %v371 = vunpack.c.h.b16 %v173
    %v372 = vunpack.c.l.b16 %v174
    %v373 = vunpack.c.h.b16 %v174
    %v374 = vunpack.c.l.b16 %v175
    %v375 = vunpack.c.h.b16 %v175
    %v376 = vunpack.c.l.b16 %v176
    %v377 = vunpack.c.h.b16 %v176
    %v378 = vunpack.c.l.b16 %v177
    %v379 = vunpack.c.h.b16 %v177
    %v380 = vunpack.c.l.b16 %v178
    %v381 = vunpack.c.h.b16 %v178
    %v382 = vunpack.c.l.b16 %v179
    %v383 = vunpack.c.h.b16 %v179
    %v384 = vunpack.c.l.b16 %v180
    %v385 = vunpack.c.h.b16 %v180
    %v386 = vunpack.c.l.b16 %v181
    %v387 = vunpack.c.h.b16 %v181
    %v388 = vunpack.c.l.b16 %v182
    %v389 = vunpack.c.h.b16 %v182
    %v390 = vunpack.c.l.b16 %v183
    %v391 = vunpack.c.h.b16 %v183
    %v392 = vunpack.c.l.b16 %v184
    %v393 = vunpack.c.h.b16 %v184
    %v394 = vunpack.c.l.b16 %v185
    %v395 = vunpack.c.h.b16 %v185
    %v396 = vunpack.c.l.b16 %v186
    %v397 = vunpack.c.h.b16 %v186
    %v398 = vunpack.c.l.b16 %v187
    %v399 = vunpack.c.h.b16 %v187
    %v400 = vunpack.c.l.b16 %v188
    %v401 = vunpack.c.h.b16 %v188
    %v402 = vunpack.c.l.b16 %v189
    %v403 = vunpack.c.h.b16 %v189
    %v404 = vpack.c.b16 %v280, %v276
    %v405 = vpack.c.b16 %v281, %v277
    %v406 = vpack.c.b16 %v282, %v278
    %v407 = vpack.c.b16 %v283, %v279
    %v408 = vpack.c.b16 %v288, %v284
    %v409 = vpack.c.b16 %v289, %v285
    %v410 = vpack.c.b16 %v290, %v286
    %v411 = vpack.c.b16 %v291, %v287
    %v412 = vpack.c.b16 %v296, %v292
    %v413 = vpack.c.b16 %v297, %v293
    %v414 = vpack.c.b16 %v298, %v294
    %v415 = vpack.c.b16 %v299, %v295
    %v416 = vpack.c.b16 %v304, %v300
    %v417 = vpack.c.b16 %v305, %v301
    %v418 = vpack.c.b16 %v306, %v302
    %v419 = vpack.c.b16 %v307, %v303
    %v420 = vpack.c.b16 %v312, %v308
    %v421 = vpack.c.b16 %v313, %v309
    %v422 = vpack.c.b16 %v314, %v310
    %v423 = vpack.c.b16 %v315, %v311
    %v424 = vpack.c.b16 %v320, %v316
    %v425 = vpack.c.b16 %v321, %v317
    %v426 = vpack.c.b16 %v322, %v318
    %v427 = vpack.c.b16 %v323, %v319
    %v428 = vpack.c.b16 %v328, %v324
    %v429 = vpack.c.b16 %v329, %v325
    %v430 = vpack.c.b16 %v330, %v326
    %v431 = vpack.c.b16 %v331, %v327
    %v432 = vpack.c.b16 %v336, %v332
    %v433 = vpack.c.b16 %v337, %v333
    %v434 = vpack.c.b16 %v338, %v334
    %v435 = vpack.c.b16 %v339, %v335
    %v436 = vpack.c.b16 %v344, %v340
    %v437 = vpack.c.b16 %v345, %v341
    %v438 = vpack.c.b16 %v346, %v342
    %v439 = vpack.c.b16 %v347, %v343
    %v440 = vpack.c.b16 %v352, %v348
    %v441 = vpack.c.b16 %v353, %v349
    %v442 = vpack.c.b16 %v354, %v350
    %v443 = vpack.c.b16 %v355, %v351
    %v444 = vpack.c.b16 %v360, %v356
    %v445 = vpack.c.b16 %v361, %v357
    %v446 = vpack.c.b16 %v362, %v358
    %v447 = vpack.c.b16 %v363, %v359
    %v448 = vpack.c.b16 %v368, %v364
    %v449 = vpack.c.b16 %v369, %v365
    %v450 = vpack.c.b16 %v370, %v366
    %v451 = vpack.c.b16 %v371, %v367
    %v452 = vpack.c.b16 %v376, %v372
    %v453 = vpack.c.b16 %v377, %v373
    %v454 = vpack.c.b16 %v378, %v374
    %v455 = vpack.c.b16 %v379, %v375
    %v456 = vpack.c.b16 %v384, %v380
    %v457 = vpack.c.b16 %v385, %v381
    %v458 = vpack.c.b16 %v386, %v382
    %v459 = vpack.c.b16 %v387, %v383
    %v460 = vpack.c.b16 %v392, %v388
    %v461 = vpack.c.b16 %v393, %v389
    %v462 = vpack.c.b16 %v394, %v390
    %v463 = vpack.c.b16 %v395, %v391
    %v464 = vpack.c.b16 %v400, %v396
    %v465 = vpack.c.b16 %v401, %v397
    %v466 = vpack.c.b16 %v402, %v398
    %v467 = vpack.c.b16 %v403, %v399
    %532 = vmatprep.subr.bf16.mxu0 %v433
    %533 = vmatpush1.bf16.msra.mxu0 %v432
    %534 = vmatprep.subr.bf16.mxu0 %v429
    %535 = vmatpush1.bf16.msra.mxu0 %v428
    %536 = vmatprep.subr.bf16.mxu0 %v425
    %537 = vmatpush1.bf16.msra.mxu0 %v424
    %538 = vmatprep.subr.bf16.mxu0 %v421
    %539 = vmatpush1.bf16.msra.mxu0 %v420
    %540 = vmatprep.subr.bf16.mxu0 %v417
    %541 = vmatpush1.bf16.msra.mxu0 %v416
    %542 = vmatprep.subr.bf16.mxu0 %v413
    %543 = vmatpush1.bf16.msra.mxu0 %v412
    %544 = vmatprep.subr.bf16.mxu0 %v409
    %545 = vmatpush1.bf16.msra.mxu0 %v408
    %546 = vmatprep.subr.bf16.mxu0 %v405
    %547 = vmatpush1.bf16.msra.mxu0 %v404
    %548 = vmatprep.subr.bf16.mxu0 %v465
    %549 = vmatpush2.bf16.msra.mxu0 %v464
    %550 = vmatprep.subr.bf16.mxu0 %v461
    %551 = vmatpush2.bf16.msra.mxu0 %v460
    %552 = vmatprep.subr.bf16.mxu0 %v457
    %553 = vmatpush2.bf16.msra.mxu0 %v456
    %554 = vmatprep.subr.bf16.mxu0 %v453
    %555 = vmatpush2.bf16.msra.mxu0 %v452
    %556 = vmatprep.subr.bf16.mxu0 %v449
    %557 = vmatpush2.bf16.msra.mxu0 %v448
    %558 = vmatprep.subr.bf16.mxu0 %v445
    %559 = vmatpush2.bf16.msra.mxu0 %v444
    %560 = vmatprep.subr.bf16.mxu0 %v441
    %561 = vmatpush2.bf16.msra.mxu0 %v440
    %562 = vmatprep.subr.bf16.mxu0 %v437
    %563 = vmatpush2.bf16.msra.mxu0 %v436
    %564 = vmatprep.mubr.bf16.mxu0 %v125
    %565 = vmatmul.mubr.bf16.gmra.mxu0 %v124
    %v566 = vpop.f32.mrf.mxu0
    %v567 = vadd.f32 %v195, %v566
    %v568 = vpop.f32.mrf.mxu0
    %v569 = vadd.f32 %v199, %v568
    %v570 = vpop.f32.mrf.mxu0
    %v571 = vpop.f32.mrf.mxu0
    %572 = vdwg.mxu0
    %573 = vmatprep.subr.bf16.mxu0 %v435
    %574 = vmatpush1.bf16.msra.mxu0 %v434
    %575 = vmatprep.subr.bf16.mxu0 %v431
    %576 = vmatpush1.bf16.msra.mxu0 %v430
    %577 = vmatprep.subr.bf16.mxu0 %v427
    %578 = vmatpush1.bf16.msra.mxu0 %v426
    %579 = vmatprep.subr.bf16.mxu0 %v423
    %580 = vmatpush1.bf16.msra.mxu0 %v422
    %581 = vmatprep.subr.bf16.mxu0 %v419
    %582 = vmatpush1.bf16.msra.mxu0 %v418
    %583 = vmatprep.subr.bf16.mxu0 %v415
    %584 = vmatpush1.bf16.msra.mxu0 %v414
    %585 = vmatprep.subr.bf16.mxu0 %v411
    %586 = vmatpush1.bf16.msra.mxu0 %v410
    %587 = vmatprep.subr.bf16.mxu0 %v407
    %588 = vmatpush1.bf16.msra.mxu0 %v406
    %589 = vmatprep.subr.bf16.mxu0 %v467
    %590 = vmatpush2.bf16.msra.mxu0 %v466
    %591 = vmatprep.subr.bf16.mxu0 %v463
    %592 = vmatpush2.bf16.msra.mxu0 %v462
    %593 = vmatprep.subr.bf16.mxu0 %v459
    %594 = vmatpush2.bf16.msra.mxu0 %v458
    %595 = vmatprep.subr.bf16.mxu0 %v455
    %596 = vmatpush2.bf16.msra.mxu0 %v454
    %597 = vmatprep.subr.bf16.mxu0 %v451
    %598 = vmatpush2.bf16.msra.mxu0 %v450
    %599 = vmatprep.subr.bf16.mxu0 %v447
    %600 = vmatpush2.bf16.msra.mxu0 %v446
    %601 = vmatprep.subr.bf16.mxu0 %v443
    %602 = vmatpush2.bf16.msra.mxu0 %v442
    %603 = vmatprep.subr.bf16.mxu0 %v439
    %604 = vmatpush2.bf16.msra.mxu0 %v438
    %605 = vmatprep.mubr.bf16.mxu0 %v125
    %606 = vmatmul.mubr.bf16.gmra.mxu0 %v124
    %v607 = vpop.f32.mrf.mxu0
    %v608 = vadd.f32 %v203, %v607
    %v609 = vpop.f32.mrf.mxu0
    %v610 = vadd.f32 %v207, %v609
    %v611 = vpop.f32.mrf.mxu0
    %v612 = vpop.f32.mrf.mxu0
    %613 = vdwg.mxu0
    %v614 = vmax.f32 %v567, 0.0
    %v615 = vmax.f32 %v569, 0.0
    %v616 = vmax.f32 %v608, 0.0
    %v617 = vmax.f32 %v610, 0.0
    %v618 = vpack.c.bf16 %v614, %v614
    %v619 = vpack.c.bf16 %v615, %v615
    %v620 = vpack.c.bf16 %v616, %v616
    %v621 = vpack.c.bf16 %v617, %v617
    %v622 = vld [vmem:[#allocation7] sm:$0xff]
    %v623 = vld [vmem:[#allocation7 + $0x8] sm:$0xff]
    %v624 = vld [vmem:[#allocation7 + $0x10] sm:$0xff]
    %v625 = vld [vmem:[#allocation7 + $0x18] sm:$0xf]
    %v626 = vld [vmem:[#allocation7 + $0x1c] sm:$0xff]
    %v627 = vld [vmem:[#allocation7 + $0x24] sm:$0xff]
    %v628 = vld [vmem:[#allocation7 + $0x2c] sm:$0xff]
    %v629 = vld [vmem:[#allocation7 + $0x34] sm:$0xf]
    %v630 = vld [vmem:[#allocation7 + $0x38] sm:$0xff]
    %v631 = vld [vmem:[#allocation7 + $0x40] sm:$0xff]
    %v632 = vld [vmem:[#allocation7 + $0x48] sm:$0xff]
    %v633 = vld [vmem:[#allocation7 + $0x50] sm:$0xf]
    %v634 = vld [vmem:[#allocation7 + $0x54] sm:$0xff]
    %v635 = vld [vmem:[#allocation7 + $0x5c] sm:$0xff]
    %v636 = vld [vmem:[#allocation7 + $0x64] sm:$0xff]
    %v637 = vld [vmem:[#allocation7 + $0x6c] sm:$0xf]
    %v638 = vld [vmem:[#allocation7 + $0x70] sm:$0xff]
    %v639 = vld [vmem:[#allocation7 + $0x78] sm:$0xff]
    %v640 = vld [vmem:[#allocation7 + $0x80] sm:$0xff]
    %v641 = vld [vmem:[#allocation7 + $0x88] sm:$0xf]
    %v642 = vld [vmem:[#allocation7 + $0x8c] sm:$0xff]
    %v643 = vld [vmem:[#allocation7 + $0x94] sm:$0xff]
    %v644 = vld [vmem:[#allocation7 + $0x9c] sm:$0xff]
    %v645 = vld [vmem:[#allocation7 + $0xa4] sm:$0xf]
    %v646 = vld [vmem:[#allocation7 + $0xa8] sm:$0xff]
    %v647 = vld [vmem:[#allocation7 + $0xb0] sm:$0xff]
    %v648 = vld [vmem:[#allocation7 + $0xb8] sm:$0xff]
    %v649 = vld [vmem:[#allocation7 + $0xc0] sm:$0xf]
    %v650 = vld [vmem:[#allocation7 + $0xc4] sm:$0xff]
    %v651 = vld [vmem:[#allocation7 + $0xcc] sm:$0xff]
    %v652 = vld [vmem:[#allocation7 + $0xd4] sm:$0xff]
    %v653 = vld [vmem:[#allocation7 + $0xdc] sm:$0xf]
    %v654 = vld [vmem:[#allocation7 + $0xe0] sm:$0xff]
    %v655 = vld [vmem:[#allocation7 + $0xe8] sm:$0xff]
    %v656 = vld [vmem:[#allocation7 + $0xf0] sm:$0xff]
    %v657 = vld [vmem:[#allocation7 + $0xf8] sm:$0xf]
    %v658 = vld [vmem:[#allocation7 + $0xfc] sm:$0xff]
    %v659 = vld [vmem:[#allocation7 + $0x104] sm:$0xff]
    %v660 = vld [vmem:[#allocation7 + $0x10c] sm:$0xff]
    %v661 = vld [vmem:[#allocation7 + $0x114] sm:$0xf]
    %v662 = vld [vmem:[#allocation7 + $0x118] sm:$0xff]
    %v663 = vld [vmem:[#allocation7 + $0x120] sm:$0xff]
    %v664 = vld [vmem:[#allocation7 + $0x128] sm:$0xff]
    %v665 = vld [vmem:[#allocation7 + $0x130] sm:$0xf]
    %v666 = vld [vmem:[#allocation7 + $0x134] sm:$0xff]
    %v667 = vld [vmem:[#allocation7 + $0x13c] sm:$0xff]
    %v668 = vld [vmem:[#allocation7 + $0x144] sm:$0xff]
    %v669 = vld [vmem:[#allocation7 + $0x14c] sm:$0xf]
    %v670 = vld [vmem:[#allocation7 + $0x150] sm:$0xff]
    %v671 = vld [vmem:[#allocation7 + $0x158] sm:$0xff]
    %v672 = vld [vmem:[#allocation7 + $0x160] sm:$0xff]
    %v673 = vld [vmem:[#allocation7 + $0x168] sm:$0xf]
    %v674 = vld [vmem:[#allocation7 + $0x16c] sm:$0xff]
    %v675 = vld [vmem:[#allocation7 + $0x174] sm:$0xff]
    %v676 = vld [vmem:[#allocation7 + $0x17c] sm:$0xff]
    %v677 = vld [vmem:[#allocation7 + $0x184] sm:$0xf]
    %v678 = vld [vmem:[#allocation7 + $0x188] sm:$0xff]
    %v679 = vld [vmem:[#allocation7 + $0x190] sm:$0xff]
    %v680 = vld [vmem:[#allocation7 + $0x198] sm:$0xff]
    %v681 = vld [vmem:[#allocation7 + $0x1a0] sm:$0xf]
    %v682 = vld [vmem:[#allocation7 + $0x1a4] sm:$0xff]
    %v683 = vld [vmem:[#allocation7 + $0x1ac] sm:$0xff]
    %v684 = vld [vmem:[#allocation7 + $0x1b4] sm:$0xff]
    %v685 = vld [vmem:[#allocation7 + $0x1bc] sm:$0xf]
    %v686 = vld [vmem:[#allocation7 + $0x1c0] sm:$0xff]
    %v687 = vld [vmem:[#allocation7 + $0x1c8] sm:$0xff]
    %v688 = vld [vmem:[#allocation7 + $0x1d0] sm:$0xff]
    %v689 = vld [vmem:[#allocation7 + $0x1d8] sm:$0xf]
    %v690 = vld [vmem:[#allocation7 + $0x1dc] sm:$0xff]
    %v691 = vld [vmem:[#allocation7 + $0x1e4] sm:$0xff]
    %v692 = vld [vmem:[#allocation7 + $0x1ec] sm:$0xff]
    %v693 = vld [vmem:[#allocation7 + $0x1f4] sm:$0xf]
    %v694 = vld [vmem:[#allocation7 + $0x1f8] sm:$0xff]
    %v695 = vld [vmem:[#allocation7 + $0x200] sm:$0xff]
    %v696 = vld [vmem:[#allocation7 + $0x208] sm:$0xff]
    %v697 = vld [vmem:[#allocation7 + $0x210] sm:$0xf]
    %v698 = vld [vmem:[#allocation7 + $0x214] sm:$0xff]
    %v699 = vld [vmem:[#allocation7 + $0x21c] sm:$0xff]
    %v700 = vld [vmem:[#allocation7 + $0x224] sm:$0xff]
    %v701 = vld [vmem:[#allocation7 + $0x22c] sm:$0xf]
    %v702 = vld [vmem:[#allocation7 + $0x230] sm:$0xff]
    %v703 = vld [vmem:[#allocation7 + $0x238] sm:$0xff]
    %v704 = vld [vmem:[#allocation7 + $0x240] sm:$0xff]
    %v705 = vld [vmem:[#allocation7 + $0x248] sm:$0xf]
    %v706 = vld [vmem:[#allocation7 + $0x24c] sm:$0xff]
    %v707 = vld [vmem:[#allocation7 + $0x254] sm:$0xff]
    %v708 = vld [vmem:[#allocation7 + $0x25c] sm:$0xff]
    %v709 = vld [vmem:[#allocation7 + $0x264] sm:$0xf]
    %v710 = vld [vmem:[#allocation7 + $0x268] sm:$0xff]
    %v711 = vld [vmem:[#allocation7 + $0x270] sm:$0xff]
    %v712 = vld [vmem:[#allocation7 + $0x278] sm:$0xff]
    %v713 = vld [vmem:[#allocation7 + $0x280] sm:$0xf]
    %v714 = vld [vmem:[#allocation7 + $0x284] sm:$0xff]
    %v715 = vld [vmem:[#allocation7 + $0x28c] sm:$0xff]
    %v716 = vld [vmem:[#allocation7 + $0x294] sm:$0xff]
    %v717 = vld [vmem:[#allocation7 + $0x29c] sm:$0xf]
    %v718 = vld [vmem:[#allocation7 + $0x2a0] sm:$0xff]
    %v719 = vld [vmem:[#allocation7 + $0x2a8] sm:$0xff]
    %v720 = vld [vmem:[#allocation7 + $0x2b0] sm:$0xff]
    %v721 = vld [vmem:[#allocation7 + $0x2b8] sm:$0xf]
    %v722 = vld [vmem:[#allocation7 + $0x2bc] sm:$0xff]
    %v723 = vld [vmem:[#allocation7 + $0x2c4] sm:$0xff]
    %v724 = vld [vmem:[#allocation7 + $0x2cc] sm:$0xff]
    %v725 = vld [vmem:[#allocation7 + $0x2d4] sm:$0xf]
    %v726 = vld [vmem:[#allocation7 + $0x2d8] sm:$0xff]
    %v727 = vld [vmem:[#allocation7 + $0x2e0] sm:$0xff]
    %v728 = vld [vmem:[#allocation7 + $0x2e8] sm:$0xff]
    %v729 = vld [vmem:[#allocation7 + $0x2f0] sm:$0xf]
    %v730 = vld [vmem:[#allocation7 + $0x2f4] sm:$0xff]
    %v731 = vld [vmem:[#allocation7 + $0x2fc] sm:$0xff]
    %v732 = vld [vmem:[#allocation7 + $0x304] sm:$0xff]
    %v733 = vld [vmem:[#allocation7 + $0x30c] sm:$0xf]
    %v734 = vld [vmem:[#allocation7 + $0x310] sm:$0xff]
    %v735 = vld [vmem:[#allocation7 + $0x318] sm:$0xff]
    %v736 = vld [vmem:[#allocation7 + $0x320] sm:$0xff]
    %v737 = vld [vmem:[#allocation7 + $0x328] sm:$0xf]
    %v738 = vld [vmem:[#allocation7 + $0x32c] sm:$0xff]
    %v739 = vld [vmem:[#allocation7 + $0x334] sm:$0xff]
    %v740 = vld [vmem:[#allocation7 + $0x33c] sm:$0xff]
    %v741 = vld [vmem:[#allocation7 + $0x344] sm:$0xf]
    %v742 = vld [vmem:[#allocation7 + $0x348] sm:$0xff]
    %v743 = vld [vmem:[#allocation7 + $0x350] sm:$0xff]
    %v744 = vld [vmem:[#allocation7 + $0x358] sm:$0xff]
    %v745 = vld [vmem:[#allocation7 + $0x360] sm:$0xf]
    %v746 = vld [vmem:[#allocation7 + $0x364] sm:$0xff]
    %v747 = vld [vmem:[#allocation7 + $0x36c] sm:$0xff]
    %v748 = vld [vmem:[#allocation7 + $0x374] sm:$0xff]
    %v749 = vld [vmem:[#allocation7 + $0x37c] sm:$0xf]
    %v750 = vld [vmem:[#allocation7 + $0x380] sm:$0xff]
    %v751 = vld [vmem:[#allocation7 + $0x388] sm:$0xff]
    %v752 = vld [vmem:[#allocation7 + $0x390] sm:$0xff]
    %v753 = vld [vmem:[#allocation7 + $0x398] sm:$0xf]
    %v754 = vld [vmem:[#allocation7 + $0x39c] sm:$0xff]
    %v755 = vld [vmem:[#allocation7 + $0x3a4] sm:$0xff]
    %v756 = vld [vmem:[#allocation7 + $0x3ac] sm:$0xff]
    %v757 = vld [vmem:[#allocation7 + $0x3b4] sm:$0xf]
    %v758 = vld [vmem:[#allocation7 + $0x3b8] sm:$0xff]
    %v759 = vld [vmem:[#allocation7 + $0x3c0] sm:$0xff]
    %v760 = vld [vmem:[#allocation7 + $0x3c8] sm:$0xff]
    %v761 = vld [vmem:[#allocation7 + $0x3d0] sm:$0xf]
    %v762 = vld [vmem:[#allocation7 + $0x3d4] sm:$0xff]
    %v763 = vld [vmem:[#allocation7 + $0x3dc] sm:$0xff]
    %v764 = vld [vmem:[#allocation7 + $0x3e4] sm:$0xff]
    %v765 = vld [vmem:[#allocation7 + $0x3ec] sm:$0xf]
    %v766 = vld [vmem:[#allocation7 + $0x3f0] sm:$0xff]
    %v767 = vld [vmem:[#allocation7 + $0x3f8] sm:$0xff]
    %v768 = vld [vmem:[#allocation7 + $0x400] sm:$0xff]
    %v769 = vld [vmem:[#allocation7 + $0x408] sm:$0xf]
    %v770 = vld [vmem:[#allocation7 + $0x40c] sm:$0xff]
    %v771 = vld [vmem:[#allocation7 + $0x414] sm:$0xff]
    %v772 = vld [vmem:[#allocation7 + $0x41c] sm:$0xff]
    %v773 = vld [vmem:[#allocation7 + $0x424] sm:$0xf]
    %v774 = vld [vmem:[#allocation7 + $0x428] sm:$0xff]
    %v775 = vld [vmem:[#allocation7 + $0x430] sm:$0xff]
    %v776 = vld [vmem:[#allocation7 + $0x438] sm:$0xff]
    %v777 = vld [vmem:[#allocation7 + $0x440] sm:$0xf]
    %v778 = vld [vmem:[#allocation7 + $0x444] sm:$0xff]
    %v779 = vld [vmem:[#allocation7 + $0x44c] sm:$0xff]
    %v780 = vld [vmem:[#allocation7 + $0x454] sm:$0xff]
    %v781 = vld [vmem:[#allocation7 + $0x45c] sm:$0xf]
    %v782 = vld [vmem:[#allocation7 + $0x460] sm:$0xff]
    %v783 = vld [vmem:[#allocation7 + $0x468] sm:$0xff]
    %v784 = vld [vmem:[#allocation7 + $0x470] sm:$0xff]
    %v785 = vld [vmem:[#allocation7 + $0x478] sm:$0xf]
    %v786 = vld [vmem:[#allocation7 + $0x47c] sm:$0xff]
    %v787 = vld [vmem:[#allocation7 + $0x484] sm:$0xff]
    %v788 = vld [vmem:[#allocation7 + $0x48c] sm:$0xff]
    %v789 = vld [vmem:[#allocation7 + $0x494] sm:$0xf]
    %v790 = vld [vmem:[#allocation7 + $0x498] sm:$0xff]
    %v791 = vld [vmem:[#allocation7 + $0x4a0] sm:$0xff]
    %v792 = vld [vmem:[#allocation7 + $0x4a8] sm:$0xff]
    %v793 = vld [vmem:[#allocation7 + $0x4b0] sm:$0xf]
    %v794 = vld [vmem:[#allocation7 + $0x4b4] sm:$0xff]
    %v795 = vld [vmem:[#allocation7 + $0x4bc] sm:$0xff]
    %v796 = vld [vmem:[#allocation7 + $0x4c4] sm:$0xff]
    %v797 = vld [vmem:[#allocation7 + $0x4cc] sm:$0xf]
    %v798 = vld [vmem:[#allocation7 + $0x4d0] sm:$0xff]
    %v799 = vld [vmem:[#allocation7 + $0x4d8] sm:$0xff]
    %v800 = vld [vmem:[#allocation7 + $0x4e0] sm:$0xff]
    %v801 = vld [vmem:[#allocation7 + $0x4e8] sm:$0xf]
    %v802 = vld [vmem:[#allocation7 + $0x4ec] sm:$0xff]
    %v803 = vld [vmem:[#allocation7 + $0x4f4] sm:$0xff]
    %v804 = vld [vmem:[#allocation7 + $0x4fc] sm:$0xff]
    %v805 = vld [vmem:[#allocation7 + $0x504] sm:$0xf]
    %v806 = vld [vmem:[#allocation7 + $0x508] sm:$0xff]
    %v807 = vld [vmem:[#allocation7 + $0x510] sm:$0xff]
    %v808 = vld [vmem:[#allocation7 + $0x518] sm:$0xff]
    %v809 = vld [vmem:[#allocation7 + $0x520] sm:$0xf]
    %v810 = vld [vmem:[#allocation7 + $0x524] sm:$0xff]
    %v811 = vld [vmem:[#allocation7 + $0x52c] sm:$0xff]
    %v812 = vld [vmem:[#allocation7 + $0x534] sm:$0xff]
    %v813 = vld [vmem:[#allocation7 + $0x53c] sm:$0xf]
    %v814 = vld [vmem:[#allocation7 + $0x540] sm:$0xff]
    %v815 = vld [vmem:[#allocation7 + $0x548] sm:$0xff]
    %v816 = vld [vmem:[#allocation7 + $0x550] sm:$0xff]
    %v817 = vld [vmem:[#allocation7 + $0x558] sm:$0xf]
    %v818 = vld [vmem:[#allocation7 + $0x55c] sm:$0xff]
    %v819 = vld [vmem:[#allocation7 + $0x564] sm:$0xff]
    %v820 = vld [vmem:[#allocation7 + $0x56c] sm:$0xff]
    %v821 = vld [vmem:[#allocation7 + $0x574] sm:$0xf]
    %v822 = vld [vmem:[#allocation7 + $0x578] sm:$0xff]
    %v823 = vld [vmem:[#allocation7 + $0x580] sm:$0xff]
    %v824 = vld [vmem:[#allocation7 + $0x588] sm:$0xff]
    %v825 = vld [vmem:[#allocation7 + $0x590] sm:$0xf]
    %v826 = vld [vmem:[#allocation7 + $0x594] sm:$0xff]
    %v827 = vld [vmem:[#allocation7 + $0x59c] sm:$0xff]
    %v828 = vld [vmem:[#allocation7 + $0x5a4] sm:$0xff]
    %v829 = vld [vmem:[#allocation7 + $0x5ac] sm:$0xf]
    %v830 = vld [vmem:[#allocation7 + $0x5b0] sm:$0xff]
    %v831 = vld [vmem:[#allocation7 + $0x5b8] sm:$0xff]
    %v832 = vld [vmem:[#allocation7 + $0x5c0] sm:$0xff]
    %v833 = vld [vmem:[#allocation7 + $0x5c8] sm:$0xf]
    %v834 = vld [vmem:[#allocation7 + $0x5cc] sm:$0xff]
    %v835 = vld [vmem:[#allocation7 + $0x5d4] sm:$0xff]
    %v836 = vld [vmem:[#allocation7 + $0x5dc] sm:$0xff]
    %v837 = vld [vmem:[#allocation7 + $0x5e4] sm:$0xf]
    %v838 = vld [vmem:[#allocation7 + $0x5e8] sm:$0xff]
    %v839 = vld [vmem:[#allocation7 + $0x5f0] sm:$0xff]
    %v840 = vld [vmem:[#allocation7 + $0x5f8] sm:$0xff]
    %v841 = vld [vmem:[#allocation7 + $0x600] sm:$0xf]
    %v842 = vld [vmem:[#allocation7 + $0x604] sm:$0xff]
    %v843 = vld [vmem:[#allocation7 + $0x60c] sm:$0xff]
    %v844 = vld [vmem:[#allocation7 + $0x614] sm:$0xff]
    %v845 = vld [vmem:[#allocation7 + $0x61c] sm:$0xf]
    %v846 = vld [vmem:[#allocation7 + $0x620] sm:$0xff]
    %v847 = vld [vmem:[#allocation7 + $0x628] sm:$0xff]
    %v848 = vld [vmem:[#allocation7 + $0x630] sm:$0xff]
    %v849 = vld [vmem:[#allocation7 + $0x638] sm:$0xf]
    %v850 = vld [vmem:[#allocation7 + $0x63c] sm:$0xff]
    %v851 = vld [vmem:[#allocation7 + $0x644] sm:$0xff]
    %v852 = vld [vmem:[#allocation7 + $0x64c] sm:$0xff]
    %v853 = vld [vmem:[#allocation7 + $0x654] sm:$0xf]
    %v854 = vld [vmem:[#allocation7 + $0x658] sm:$0xff]
    %v855 = vld [vmem:[#allocation7 + $0x660] sm:$0xff]
    %v856 = vld [vmem:[#allocation7 + $0x668] sm:$0xff]
    %v857 = vld [vmem:[#allocation7 + $0x670] sm:$0xf]
    %v858 = vld [vmem:[#allocation7 + $0x674] sm:$0xff]
    %v859 = vld [vmem:[#allocation7 + $0x67c] sm:$0xff]
    %v860 = vld [vmem:[#allocation7 + $0x684] sm:$0xff]
    %v861 = vld [vmem:[#allocation7 + $0x68c] sm:$0xf]
    %v862 = vld [vmem:[#allocation7 + $0x690] sm:$0xff]
    %v863 = vld [vmem:[#allocation7 + $0x698] sm:$0xff]
    %v864 = vld [vmem:[#allocation7 + $0x6a0] sm:$0xff]
    %v865 = vld [vmem:[#allocation7 + $0x6a8] sm:$0xf]
    %v866 = vld [vmem:[#allocation7 + $0x6ac] sm:$0xff]
    %v867 = vld [vmem:[#allocation7 + $0x6b4] sm:$0xff]
    %v868 = vld [vmem:[#allocation7 + $0x6bc] sm:$0xff]
    %v869 = vld [vmem:[#allocation7 + $0x6c4] sm:$0xf]
    %v870 = vld [vmem:[#allocation7 + $0x6c8] sm:$0xff]
    %v871 = vld [vmem:[#allocation7 + $0x6d0] sm:$0xff]
    %v872 = vld [vmem:[#allocation7 + $0x6d8] sm:$0xff]
    %v873 = vld [vmem:[#allocation7 + $0x6e0] sm:$0xf]
    %v874 = vld [vmem:[#allocation7 + $0x6e4] sm:$0xff]
    %v875 = vld [vmem:[#allocation7 + $0x6ec] sm:$0xff]
    %v876 = vld [vmem:[#allocation7 + $0x6f4] sm:$0xff]
    %v877 = vld [vmem:[#allocation7 + $0x6fc] sm:$0xf]
    %v878 = vld [vmem:[%s6] sm:$0xff]
    %v880 = vlaneseq
    %v881 = vshrl.u32 %v880, 7
    %v882 = vsub.s32 0, %v881
    %v883 = vrot.slane %v878, %v882
    %v884 = vlaneseq
    %v885 = vshrl.u32 %v884, 7
    %v886 = vsub.s32 1, %v885
    %v887 = vrot.slane %v878, %v886
    %v888 = vlaneseq
    %v889 = vshrl.u32 %v888, 7
    %v890 = vsub.s32 2, %v889
    %v891 = vrot.slane %v878, %v890
    %v892 = vlaneseq
    %v893 = vshrl.u32 %v892, 7
    %v894 = vsub.s32 3, %v893
    %v895 = vrot.slane %v878, %v894
    %v896 = vlaneseq
    %v897 = vshrl.u32 %v896, 7
    %v898 = vsub.s32 4, %v897
    %v899 = vrot.slane %v878, %v898
    %v900 = vlaneseq
    %v901 = vshrl.u32 %v900, 7
    %v902 = vsub.s32 5, %v901
    %v903 = vrot.slane %v878, %v902
    %v904 = vlaneseq
    %v905 = vshrl.u32 %v904, 7
    %v906 = vsub.s32 6, %v905
    %v907 = vrot.slane %v878, %v906
    %v1171 = vunpack.c.l.b16 %v622
    %v1172 = vunpack.c.h.b16 %v622
    %v1173 = vunpack.c.l.b16 %v623
    %v1174 = vunpack.c.h.b16 %v623
    %v1175 = vunpack.c.l.b16 %v624
    %v1176 = vunpack.c.h.b16 %v624
    %v1177 = vunpack.c.l.b16 %v625
    %v1178 = vunpack.c.l.b16 %v626
    %v1179 = vunpack.c.h.b16 %v626
    %v1180 = vunpack.c.l.b16 %v627
    %v1181 = vunpack.c.h.b16 %v627
    %v1182 = vunpack.c.l.b16 %v628
    %v1183 = vunpack.c.h.b16 %v628
    %v1184 = vunpack.c.l.b16 %v629
    %v1185 = vunpack.c.l.b16 %v630
    %v1186 = vunpack.c.h.b16 %v630
    %v1187 = vunpack.c.l.b16 %v631
    %v1188 = vunpack.c.h.b16 %v631
    %v1189 = vunpack.c.l.b16 %v632
    %v1190 = vunpack.c.h.b16 %v632
    %v1191 = vunpack.c.l.b16 %v633
    %v1192 = vunpack.c.l.b16 %v634
    %v1193 = vunpack.c.h.b16 %v634
    %v1194 = vunpack.c.l.b16 %v635
    %v1195 = vunpack.c.h.b16 %v635
    %v1196 = vunpack.c.l.b16 %v636
    %v1197 = vunpack.c.h.b16 %v636
    %v1198 = vunpack.c.l.b16 %v637
    %v1199 = vunpack.c.l.b16 %v638
    %v1200 = vunpack.c.h.b16 %v638
    %v1201 = vunpack.c.l.b16 %v639
    %v1202 = vunpack.c.h.b16 %v639
    %v1203 = vunpack.c.l.b16 %v640
    %v1204 = vunpack.c.h.b16 %v640
    %v1205 = vunpack.c.l.b16 %v641
    %v1206 = vunpack.c.l.b16 %v642
    %v1207 = vunpack.c.h.b16 %v642
    %v1208 = vunpack.c.l.b16 %v643
    %v1209 = vunpack.c.h.b16 %v643
    %v1210 = vunpack.c.l.b16 %v644
    %v1211 = vunpack.c.h.b16 %v644
    %v1212 = vunpack.c.l.b16 %v645
    %v1213 = vunpack.c.l.b16 %v646
    %v1214 = vunpack.c.h.b16 %v646
    %v1215 = vunpack.c.l.b16 %v647
    %v1216 = vunpack.c.h.b16 %v647
    %v1217 = vunpack.c.l.b16 %v648
    %v1218 = vunpack.c.h.b16 %v648
    %v1219 = vunpack.c.l.b16 %v649
    %v1220 = vunpack.c.l.b16 %v650
    %v1221 = vunpack.c.h.b16 %v650
    %v1222 = vunpack.c.l.b16 %v651
    %v1223 = vunpack.c.h.b16 %v651
    %v1224 = vunpack.c.l.b16 %v652
    %v1225 = vunpack.c.h.b16 %v652
    %v1226 = vunpack.c.l.b16 %v653
    %v1227 = vunpack.c.l.b16 %v654
    %v1228 = vunpack.c.h.b16 %v654
    %v1229 = vunpack.c.l.b16 %v655
    %v1230 = vunpack.c.h.b16 %v655
    %v1231 = vunpack.c.l.b16 %v656
    %v1232 = vunpack.c.h.b16 %v656
    %v1233 = vunpack.c.l.b16 %v657
    %v1234 = vunpack.c.l.b16 %v658
    %v1235 = vunpack.c.h.b16 %v658
    %v1236 = vunpack.c.l.b16 %v659
    %v1237 = vunpack.c.h.b16 %v659
    %v1238 = vunpack.c.l.b16 %v660
    %v1239 = vunpack.c.h.b16 %v660
    %v1240 = vunpack.c.l.b16 %v661
    %v1241 = vunpack.c.l.b16 %v662
    %v1242 = vunpack.c.h.b16 %v662
    %v1243 = vunpack.c.l.b16 %v663
    %v1244 = vunpack.c.h.b16 %v663
    %v1245 = vunpack.c.l.b16 %v664
    %v1246 = vunpack.c.h.b16 %v664
    %v1247 = vunpack.c.l.b16 %v665
    %v1248 = vunpack.c.l.b16 %v666
    %v1249 = vunpack.c.h.b16 %v666
    %v1250 = vunpack.c.l.b16 %v667
    %v1251 = vunpack.c.h.b16 %v667
    %v1252 = vunpack.c.l.b16 %v668
    %v1253 = vunpack.c.h.b16 %v668
    %v1254 = vunpack.c.l.b16 %v669
    %v1255 = vunpack.c.l.b16 %v670
    %v1256 = vunpack.c.h.b16 %v670
    %v1257 = vunpack.c.l.b16 %v671
    %v1258 = vunpack.c.h.b16 %v671
    %v1259 = vunpack.c.l.b16 %v672
    %v1260 = vunpack.c.h.b16 %v672
    %v1261 = vunpack.c.l.b16 %v673
    %v1262 = vunpack.c.l.b16 %v674
    %v1263 = vunpack.c.h.b16 %v674
    %v1264 = vunpack.c.l.b16 %v675
    %v1265 = vunpack.c.h.b16 %v675
    %v1266 = vunpack.c.l.b16 %v676
    %v1267 = vunpack.c.h.b16 %v676
    %v1268 = vunpack.c.l.b16 %v677
    %v1269 = vunpack.c.l.b16 %v678
    %v1270 = vunpack.c.h.b16 %v678
    %v1271 = vunpack.c.l.b16 %v679
    %v1272 = vunpack.c.h.b16 %v679
    %v1273 = vunpack.c.l.b16 %v680
    %v1274 = vunpack.c.h.b16 %v680
    %v1275 = vunpack.c.l.b16 %v681
    %v1276 = vunpack.c.l.b16 %v682
    %v1277 = vunpack.c.h.b16 %v682
    %v1278 = vunpack.c.l.b16 %v683
    %v1279 = vunpack.c.h.b16 %v683
    %v1280 = vunpack.c.l.b16 %v684
    %v1281 = vunpack.c.h.b16 %v684
    %v1282 = vunpack.c.l.b16 %v685
    %v1283 = vunpack.c.l.b16 %v686
    %v1284 = vunpack.c.h.b16 %v686
    %v1285 = vunpack.c.l.b16 %v687
    %v1286 = vunpack.c.h.b16 %v687
    %v1287 = vunpack.c.l.b16 %v688
    %v1288 = vunpack.c.h.b16 %v688
    %v1289 = vunpack.c.l.b16 %v689
    %v1290 = vunpack.c.l.b16 %v690
    %v1291 = vunpack.c.h.b16 %v690
    %v1292 = vunpack.c.l.b16 %v691
    %v1293 = vunpack.c.h.b16 %v691
    %v1294 = vunpack.c.l.b16 %v692
    %v1295 = vunpack.c.h.b16 %v692
    %v1296 = vunpack.c.l.b16 %v693
    %v1297 = vunpack.c.l.b16 %v694
    %v1298 = vunpack.c.h.b16 %v694
    %v1299 = vunpack.c.l.b16 %v695
    %v1300 = vunpack.c.h.b16 %v695
    %v1301 = vunpack.c.l.b16 %v696
    %v1302 = vunpack.c.h.b16 %v696
    %v1303 = vunpack.c.l.b16 %v697
    %v1304 = vunpack.c.l.b16 %v698
    %v1305 = vunpack.c.h.b16 %v698
    %v1306 = vunpack.c.l.b16 %v699
    %v1307 = vunpack.c.h.b16 %v699
    %v1308 = vunpack.c.l.b16 %v700
    %v1309 = vunpack.c.h.b16 %v700
    %v1310 = vunpack.c.l.b16 %v701
    %v1311 = vunpack.c.l.b16 %v702
    %v1312 = vunpack.c.h.b16 %v702
    %v1313 = vunpack.c.l.b16 %v703
    %v1314 = vunpack.c.h.b16 %v703
    %v1315 = vunpack.c.l.b16 %v704
    %v1316 = vunpack.c.h.b16 %v704
    %v1317 = vunpack.c.l.b16 %v705
    %v1318 = vunpack.c.l.b16 %v706
    %v1319 = vunpack.c.h.b16 %v706
    %v1320 = vunpack.c.l.b16 %v707
    %v1321 = vunpack.c.h.b16 %v707
    %v1322 = vunpack.c.l.b16 %v708
    %v1323 = vunpack.c.h.b16 %v708
    %v1324 = vunpack.c.l.b16 %v709
    %v1325 = vunpack.c.l.b16 %v710
    %v1326 = vunpack.c.h.b16 %v710
    %v1327 = vunpack.c.l.b16 %v711
    %v1328 = vunpack.c.h.b16 %v711
    %v1329 = vunpack.c.l.b16 %v712
    %v1330 = vunpack.c.h.b16 %v712
    %v1331 = vunpack.c.l.b16 %v713
    %v1332 = vunpack.c.l.b16 %v714
    %v1333 = vunpack.c.h.b16 %v714
    %v1334 = vunpack.c.l.b16 %v715
    %v1335 = vunpack.c.h.b16 %v715
    %v1336 = vunpack.c.l.b16 %v716
    %v1337 = vunpack.c.h.b16 %v716
    %v1338 = vunpack.c.l.b16 %v717
    %v1339 = vunpack.c.l.b16 %v718
    %v1340 = vunpack.c.h.b16 %v718
    %v1341 = vunpack.c.l.b16 %v719
    %v1342 = vunpack.c.h.b16 %v719
    %v1343 = vunpack.c.l.b16 %v720
    %v1344 = vunpack.c.h.b16 %v720
    %v1345 = vunpack.c.l.b16 %v721
    %v1346 = vunpack.c.l.b16 %v722
    %v1347 = vunpack.c.h.b16 %v722
    %v1348 = vunpack.c.l.b16 %v723
    %v1349 = vunpack.c.h.b16 %v723
    %v1350 = vunpack.c.l.b16 %v724
    %v1351 = vunpack.c.h.b16 %v724
    %v1352 = vunpack.c.l.b16 %v725
    %v1353 = vunpack.c.l.b16 %v726
    %v1354 = vunpack.c.h.b16 %v726
    %v1355 = vunpack.c.l.b16 %v727
    %v1356 = vunpack.c.h.b16 %v727
    %v1357 = vunpack.c.l.b16 %v728
    %v1358 = vunpack.c.h.b16 %v728
    %v1359 = vunpack.c.l.b16 %v729
    %v1360 = vunpack.c.l.b16 %v730
    %v1361 = vunpack.c.h.b16 %v730
    %v1362 = vunpack.c.l.b16 %v731
    %v1363 = vunpack.c.h.b16 %v731
    %v1364 = vunpack.c.l.b16 %v732
    %v1365 = vunpack.c.h.b16 %v732
    %v1366 = vunpack.c.l.b16 %v733
    %v1367 = vunpack.c.l.b16 %v734
    %v1368 = vunpack.c.h.b16 %v734
    %v1369 = vunpack.c.l.b16 %v735
    %v1370 = vunpack.c.h.b16 %v735
    %v1371 = vunpack.c.l.b16 %v736
    %v1372 = vunpack.c.h.b16 %v736
    %v1373 = vunpack.c.l.b16 %v737
    %v1374 = vunpack.c.l.b16 %v738
    %v1375 = vunpack.c.h.b16 %v738
    %v1376 = vunpack.c.l.b16 %v739
    %v1377 = vunpack.c.h.b16 %v739
    %v1378 = vunpack.c.l.b16 %v740
    %v1379 = vunpack.c.h.b16 %v740
    %v1380 = vunpack.c.l.b16 %v741
    %v1381 = vunpack.c.l.b16 %v742
    %v1382 = vunpack.c.h.b16 %v742
    %v1383 = vunpack.c.l.b16 %v743
    %v1384 = vunpack.c.h.b16 %v743
    %v1385 = vunpack.c.l.b16 %v744
    %v1386 = vunpack.c.h.b16 %v744
    %v1387 = vunpack.c.l.b16 %v745
    %v1388 = vunpack.c.l.b16 %v746
    %v1389 = vunpack.c.h.b16 %v746
    %v1390 = vunpack.c.l.b16 %v747
    %v1391 = vunpack.c.h.b16 %v747
    %v1392 = vunpack.c.l.b16 %v748
    %v1393 = vunpack.c.h.b16 %v748
    %v1394 = vunpack.c.l.b16 %v749
    %v1395 = vunpack.c.l.b16 %v750
    %v1396 = vunpack.c.h.b16 %v750
    %v1397 = vunpack.c.l.b16 %v751
    %v1398 = vunpack.c.h.b16 %v751
    %v1399 = vunpack.c.l.b16 %v752
    %v1400 = vunpack.c.h.b16 %v752
    %v1401 = vunpack.c.l.b16 %v753
    %v1402 = vunpack.c.l.b16 %v754
    %v1403 = vunpack.c.h.b16 %v754
    %v1404 = vunpack.c.l.b16 %v755
    %v1405 = vunpack.c.h.b16 %v755
    %v1406 = vunpack.c.l.b16 %v756
    %v1407 = vunpack.c.h.b16 %v756
    %v1408 = vunpack.c.l.b16 %v757
    %v1409 = vunpack.c.l.b16 %v758
    %v1410 = vunpack.c.h.b16 %v758
    %v1411 = vunpack.c.l.b16 %v759
    %v1412 = vunpack.c.h.b16 %v759
    %v1413 = vunpack.c.l.b16 %v760
    %v1414 = vunpack.c.h.b16 %v760
    %v1415 = vunpack.c.l.b16 %v761
    %v1416 = vunpack.c.l.b16 %v762
    %v1417 = vunpack.c.h.b16 %v762
    %v1418 = vunpack.c.l.b16 %v763
    %v1419 = vunpack.c.h.b16 %v763
    %v1420 = vunpack.c.l.b16 %v764
    %v1421 = vunpack.c.h.b16 %v764
    %v1422 = vunpack.c.l.b16 %v765
    %v1423 = vunpack.c.l.b16 %v766
    %v1424 = vunpack.c.h.b16 %v766
    %v1425 = vunpack.c.l.b16 %v767
    %v1426 = vunpack.c.h.b16 %v767
    %v1427 = vunpack.c.l.b16 %v768
    %v1428 = vunpack.c.h.b16 %v768
    %v1429 = vunpack.c.l.b16 %v769
    %v1430 = vunpack.c.l.b16 %v770
    %v1431 = vunpack.c.h.b16 %v770
    %v1432 = vunpack.c.l.b16 %v771
    %v1433 = vunpack.c.h.b16 %v771
    %v1434 = vunpack.c.l.b16 %v772
    %v1435 = vunpack.c.h.b16 %v772
    %v1436 = vunpack.c.l.b16 %v773
    %v1437 = vunpack.c.l.b16 %v774
    %v1438 = vunpack.c.h.b16 %v774
    %v1439 = vunpack.c.l.b16 %v775
    %v1440 = vunpack.c.h.b16 %v775
    %v1441 = vunpack.c.l.b16 %v776
    %v1442 = vunpack.c.h.b16 %v776
    %v1443 = vunpack.c.l.b16 %v777
    %v1444 = vunpack.c.l.b16 %v778
    %v1445 = vunpack.c.h.b16 %v778
    %v1446 = vunpack.c.l.b16 %v779
    %v1447 = vunpack.c.h.b16 %v779
    %v1448 = vunpack.c.l.b16 %v780
    %v1449 = vunpack.c.h.b16 %v780
    %v1450 = vunpack.c.l.b16 %v781
    %v1451 = vunpack.c.l.b16 %v782
    %v1452 = vunpack.c.h.b16 %v782
    %v1453 = vunpack.c.l.b16 %v783
    %v1454 = vunpack.c.h.b16 %v783
    %v1455 = vunpack.c.l.b16 %v784
    %v1456 = vunpack.c.h.b16 %v784
    %v1457 = vunpack.c.l.b16 %v785
    %v1458 = vunpack.c.l.b16 %v786
    %v1459 = vunpack.c.h.b16 %v786
    %v1460 = vunpack.c.l.b16 %v787
    %v1461 = vunpack.c.h.b16 %v787
    %v1462 = vunpack.c.l.b16 %v788
    %v1463 = vunpack.c.h.b16 %v788
    %v1464 = vunpack.c.l.b16 %v789
    %v1465 = vunpack.c.l.b16 %v790
    %v1466 = vunpack.c.h.b16 %v790
    %v1467 = vunpack.c.l.b16 %v791
    %v1468 = vunpack.c.h.b16 %v791
    %v1469 = vunpack.c.l.b16 %v792
    %v1470 = vunpack.c.h.b16 %v792
    %v1471 = vunpack.c.l.b16 %v793
    %v1472 = vunpack.c.l.b16 %v794
    %v1473 = vunpack.c.h.b16 %v794
    %v1474 = vunpack.c.l.b16 %v795
    %v1475 = vunpack.c.h.b16 %v795
    %v1476 = vunpack.c.l.b16 %v796
    %v1477 = vunpack.c.h.b16 %v796
    %v1478 = vunpack.c.l.b16 %v797
    %v1479 = vunpack.c.l.b16 %v798
    %v1480 = vunpack.c.h.b16 %v798
    %v1481 = vunpack.c.l.b16 %v799
    %v1482 = vunpack.c.h.b16 %v799
    %v1483 = vunpack.c.l.b16 %v800
    %v1484 = vunpack.c.h.b16 %v800
    %v1485 = vunpack.c.l.b16 %v801
    %v1486 = vunpack.c.l.b16 %v802
    %v1487 = vunpack.c.h.b16 %v802
    %v1488 = vunpack.c.l.b16 %v803
    %v1489 = vunpack.c.h.b16 %v803
    %v1490 = vunpack.c.l.b16 %v804
    %v1491 = vunpack.c.h.b16 %v804
    %v1492 = vunpack.c.l.b16 %v805
    %v1493 = vunpack.c.l.b16 %v806
    %v1494 = vunpack.c.h.b16 %v806
    %v1495 = vunpack.c.l.b16 %v807
    %v1496 = vunpack.c.h.b16 %v807
    %v1497 = vunpack.c.l.b16 %v808
    %v1498 = vunpack.c.h.b16 %v808
    %v1499 = vunpack.c.l.b16 %v809
    %v1500 = vunpack.c.l.b16 %v810
    %v1501 = vunpack.c.h.b16 %v810
    %v1502 = vunpack.c.l.b16 %v811
    %v1503 = vunpack.c.h.b16 %v811
    %v1504 = vunpack.c.l.b16 %v812
    %v1505 = vunpack.c.h.b16 %v812
    %v1506 = vunpack.c.l.b16 %v813
    %v1507 = vunpack.c.l.b16 %v814
    %v1508 = vunpack.c.h.b16 %v814
    %v1509 = vunpack.c.l.b16 %v815
    %v1510 = vunpack.c.h.b16 %v815
    %v1511 = vunpack.c.l.b16 %v816
    %v1512 = vunpack.c.h.b16 %v816
    %v1513 = vunpack.c.l.b16 %v817
    %v1514 = vunpack.c.l.b16 %v818
    %v1515 = vunpack.c.h.b16 %v818
    %v1516 = vunpack.c.l.b16 %v819
    %v1517 = vunpack.c.h.b16 %v819
    %v1518 = vunpack.c.l.b16 %v820
    %v1519 = vunpack.c.h.b16 %v820
    %v1520 = vunpack.c.l.b16 %v821
    %v1521 = vunpack.c.l.b16 %v822
    %v1522 = vunpack.c.h.b16 %v822
    %v1523 = vunpack.c.l.b16 %v823
    %v1524 = vunpack.c.h.b16 %v823
    %v1525 = vunpack.c.l.b16 %v824
    %v1526 = vunpack.c.h.b16 %v824
    %v1527 = vunpack.c.l.b16 %v825
    %v1528 = vunpack.c.l.b16 %v826
    %v1529 = vunpack.c.h.b16 %v826
    %v1530 = vunpack.c.l.b16 %v827
    %v1531 = vunpack.c.h.b16 %v827
    %v1532 = vunpack.c.l.b16 %v828
    %v1533 = vunpack.c.h.b16 %v828
    %v1534 = vunpack.c.l.b16 %v829
    %v1535 = vunpack.c.l.b16 %v830
    %v1536 = vunpack.c.h.b16 %v830
    %v1537 = vunpack.c.l.b16 %v831
    %v1538 = vunpack.c.h.b16 %v831
    %v1539 = vunpack.c.l.b16 %v832
    %v1540 = vunpack.c.h.b16 %v832
    %v1541 = vunpack.c.l.b16 %v833
    %v1542 = vunpack.c.l.b16 %v834
    %v1543 = vunpack.c.h.b16 %v834
    %v1544 = vunpack.c.l.b16 %v835
    %v1545 = vunpack.c.h.b16 %v835
    %v1546 = vunpack.c.l.b16 %v836
    %v1547 = vunpack.c.h.b16 %v836
    %v1548 = vunpack.c.l.b16 %v837
    %v1549 = vunpack.c.l.b16 %v838
    %v1550 = vunpack.c.h.b16 %v838
    %v1551 = vunpack.c.l.b16 %v839
    %v1552 = vunpack.c.h.b16 %v839
    %v1553 = vunpack.c.l.b16 %v840
    %v1554 = vunpack.c.h.b16 %v840
    %v1555 = vunpack.c.l.b16 %v841
    %v1556 = vunpack.c.l.b16 %v842
    %v1557 = vunpack.c.h.b16 %v842
    %v1558 = vunpack.c.l.b16 %v843
    %v1559 = vunpack.c.h.b16 %v843
    %v1560 = vunpack.c.l.b16 %v844
    %v1561 = vunpack.c.h.b16 %v844
    %v1562 = vunpack.c.l.b16 %v845
    %v1563 = vunpack.c.l.b16 %v846
    %v1564 = vunpack.c.h.b16 %v846
    %v1565 = vunpack.c.l.b16 %v847
    %v1566 = vunpack.c.h.b16 %v847
    %v1567 = vunpack.c.l.b16 %v848
    %v1568 = vunpack.c.h.b16 %v848
    %v1569 = vunpack.c.l.b16 %v849
    %v1570 = vunpack.c.l.b16 %v850
    %v1571 = vunpack.c.h.b16 %v850
    %v1572 = vunpack.c.l.b16 %v851
    %v1573 = vunpack.c.h.b16 %v851
    %v1574 = vunpack.c.l.b16 %v852
    %v1575 = vunpack.c.h.b16 %v852
    %v1576 = vunpack.c.l.b16 %v853
    %v1577 = vunpack.c.l.b16 %v854
    %v1578 = vunpack.c.h.b16 %v854
    %v1579 = vunpack.c.l.b16 %v855
    %v1580 = vunpack.c.h.b16 %v855
    %v1581 = vunpack.c.l.b16 %v856
    %v1582 = vunpack.c.h.b16 %v856
    %v1583 = vunpack.c.l.b16 %v857
    %v1584 = vunpack.c.l.b16 %v858
    %v1585 = vunpack.c.h.b16 %v858
    %v1586 = vunpack.c.l.b16 %v859
    %v1587 = vunpack.c.h.b16 %v859
    %v1588 = vunpack.c.l.b16 %v860
    %v1589 = vunpack.c.h.b16 %v860
    %v1590 = vunpack.c.l.b16 %v861
    %v1591 = vunpack.c.l.b16 %v862
    %v1592 = vunpack.c.h.b16 %v862
    %v1593 = vunpack.c.l.b16 %v863
    %v1594 = vunpack.c.h.b16 %v863
    %v1595 = vunpack.c.l.b16 %v864
    %v1596 = vunpack.c.h.b16 %v864
    %v1597 = vunpack.c.l.b16 %v865
    %v1598 = vunpack.c.l.b16 %v866
    %v1599 = vunpack.c.h.b16 %v866
    %v1600 = vunpack.c.l.b16 %v867
    %v1601 = vunpack.c.h.b16 %v867
    %v1602 = vunpack.c.l.b16 %v868
    %v1603 = vunpack.c.h.b16 %v868
    %v1604 = vunpack.c.l.b16 %v869
    %v1605 = vunpack.c.l.b16 %v870
    %v1606 = vunpack.c.h.b16 %v870
    %v1607 = vunpack.c.l.b16 %v871
    %v1608 = vunpack.c.h.b16 %v871
    %v1609 = vunpack.c.l.b16 %v872
    %v1610 = vunpack.c.h.b16 %v872
    %v1611 = vunpack.c.l.b16 %v873
    %v1612 = vunpack.c.l.b16 %v874
    %v1613 = vunpack.c.h.b16 %v874
    %v1614 = vunpack.c.l.b16 %v875
    %v1615 = vunpack.c.h.b16 %v875
    %v1616 = vunpack.c.l.b16 %v876
    %v1617 = vunpack.c.h.b16 %v876
    %v1618 = vunpack.c.l.b16 %v877
    %v1619 = vpack.c.b16 %v1178, %v1171
    %v1620 = vpack.c.b16 %v1179, %v1172
    %v1621 = vpack.c.b16 %v1180, %v1173
    %v1622 = vpack.c.b16 %v1181, %v1174
    %v1623 = vpack.c.b16 %v1182, %v1175
    %v1624 = vpack.c.b16 %v1183, %v1176
    %v1625 = vpack.c.b16 %v1184, %v1177
    %v1626 = vpack.c.b16 %v1192, %v1185
    %v1627 = vpack.c.b16 %v1193, %v1186
    %v1628 = vpack.c.b16 %v1194, %v1187
    %v1629 = vpack.c.b16 %v1195, %v1188
    %v1630 = vpack.c.b16 %v1196, %v1189
    %v1631 = vpack.c.b16 %v1197, %v1190
    %v1632 = vpack.c.b16 %v1198, %v1191
    %v1633 = vpack.c.b16 %v1206, %v1199
    %v1634 = vpack.c.b16 %v1207, %v1200
    %v1635 = vpack.c.b16 %v1208, %v1201
    %v1636 = vpack.c.b16 %v1209, %v1202
    %v1637 = vpack.c.b16 %v1210, %v1203
    %v1638 = vpack.c.b16 %v1211, %v1204
    %v1639 = vpack.c.b16 %v1212, %v1205
    %v1640 = vpack.c.b16 %v1220, %v1213
    %v1641 = vpack.c.b16 %v1221, %v1214
    %v1642 = vpack.c.b16 %v1222, %v1215
    %v1643 = vpack.c.b16 %v1223, %v1216
    %v1644 = vpack.c.b16 %v1224, %v1217
    %v1645 = vpack.c.b16 %v1225, %v1218
    %v1646 = vpack.c.b16 %v1226, %v1219
    %v1647 = vpack.c.b16 %v1234, %v1227
    %v1648 = vpack.c.b16 %v1235, %v1228
    %v1649 = vpack.c.b16 %v1236, %v1229
    %v1650 = vpack.c.b16 %v1237, %v1230
    %v1651 = vpack.c.b16 %v1238, %v1231
    %v1652 = vpack.c.b16 %v1239, %v1232
    %v1653 = vpack.c.b16 %v1240, %v1233
    %v1654 = vpack.c.b16 %v1248, %v1241
    %v1655 = vpack.c.b16 %v1249, %v1242
    %v1656 = vpack.c.b16 %v1250, %v1243
    %v1657 = vpack.c.b16 %v1251, %v1244
    %v1658 = vpack.c.b16 %v1252, %v1245
    %v1659 = vpack.c.b16 %v1253, %v1246
    %v1660 = vpack.c.b16 %v1254, %v1247
    %v1661 = vpack.c.b16 %v1262, %v1255
    %v1662 = vpack.c.b16 %v1263, %v1256
    %v1663 = vpack.c.b16 %v1264, %v1257
    %v1664 = vpack.c.b16 %v1265, %v1258
    %v1665 = vpack.c.b16 %v1266, %v1259
    %v1666 = vpack.c.b16 %v1267, %v1260
    %v1667 = vpack.c.b16 %v1268, %v1261
    %v1668 = vpack.c.b16 %v1276, %v1269
    %v1669 = vpack.c.b16 %v1277, %v1270
    %v1670 = vpack.c.b16 %v1278, %v1271
    %v1671 = vpack.c.b16 %v1279, %v1272
    %v1672 = vpack.c.b16 %v1280, %v1273
    %v1673 = vpack.c.b16 %v1281, %v1274
    %v1674 = vpack.c.b16 %v1282, %v1275
    %v1675 = vpack.c.b16 %v1290, %v1283
    %v1676 = vpack.c.b16 %v1291, %v1284
    %v1677 = vpack.c.b16 %v1292, %v1285
    %v1678 = vpack.c.b16 %v1293, %v1286
    %v1679 = vpack.c.b16 %v1294, %v1287
    %v1680 = vpack.c.b16 %v1295, %v1288
    %v1681 = vpack.c.b16 %v1296, %v1289
    %v1682 = vpack.c.b16 %v1304, %v1297
    %v1683 = vpack.c.b16 %v1305, %v1298
    %v1684 = vpack.c.b16 %v1306, %v1299
    %v1685 = vpack.c.b16 %v1307, %v1300
    %v1686 = vpack.c.b16 %v1308, %v1301
    %v1687 = vpack.c.b16 %v1309, %v1302
    %v1688 = vpack.c.b16 %v1310, %v1303
    %v1689 = vpack.c.b16 %v1318, %v1311
    %v1690 = vpack.c.b16 %v1319, %v1312
    %v1691 = vpack.c.b16 %v1320, %v1313
    %v1692 = vpack.c.b16 %v1321, %v1314
    %v1693 = vpack.c.b16 %v1322, %v1315
    %v1694 = vpack.c.b16 %v1323, %v1316
    %v1695 = vpack.c.b16 %v1324, %v1317
    %v1696 = vpack.c.b16 %v1332, %v1325
    %v1697 = vpack.c.b16 %v1333, %v1326
    %v1698 = vpack.c.b16 %v1334, %v1327
    %v1699 = vpack.c.b16 %v1335, %v1328
    %v1700 = vpack.c.b16 %v1336, %v1329
    %v1701 = vpack.c.b16 %v1337, %v1330
    %v1702 = vpack.c.b16 %v1338, %v1331
    %v1703 = vpack.c.b16 %v1346, %v1339
    %v1704 = vpack.c.b16 %v1347, %v1340
    %v1705 = vpack.c.b16 %v1348, %v1341
    %v1706 = vpack.c.b16 %v1349, %v1342
    %v1707 = vpack.c.b16 %v1350, %v1343
    %v1708 = vpack.c.b16 %v1351, %v1344
    %v1709 = vpack.c.b16 %v1352, %v1345
    %v1710 = vpack.c.b16 %v1360, %v1353
    %v1711 = vpack.c.b16 %v1361, %v1354
    %v1712 = vpack.c.b16 %v1362, %v1355
    %v1713 = vpack.c.b16 %v1363, %v1356
    %v1714 = vpack.c.b16 %v1364, %v1357
    %v1715 = vpack.c.b16 %v1365, %v1358
    %v1716 = vpack.c.b16 %v1366, %v1359
    %v1717 = vpack.c.b16 %v1374, %v1367
    %v1718 = vpack.c.b16 %v1375, %v1368
    %v1719 = vpack.c.b16 %v1376, %v1369
    %v1720 = vpack.c.b16 %v1377, %v1370
    %v1721 = vpack.c.b16 %v1378, %v1371
    %v1722 = vpack.c.b16 %v1379, %v1372
    %v1723 = vpack.c.b16 %v1380, %v1373
    %v1724 = vpack.c.b16 %v1388, %v1381
    %v1725 = vpack.c.b16 %v1389, %v1382
    %v1726 = vpack.c.b16 %v1390, %v1383
    %v1727 = vpack.c.b16 %v1391, %v1384
    %v1728 = vpack.c.b16 %v1392, %v1385
    %v1729 = vpack.c.b16 %v1393, %v1386
    %v1730 = vpack.c.b16 %v1394, %v1387
    %v1731 = vpack.c.b16 %v1402, %v1395
    %v1732 = vpack.c.b16 %v1403, %v1396
    %v1733 = vpack.c.b16 %v1404, %v1397
    %v1734 = vpack.c.b16 %v1405, %v1398
    %v1735 = vpack.c.b16 %v1406, %v1399
    %v1736 = vpack.c.b16 %v1407, %v1400
    %v1737 = vpack.c.b16 %v1408, %v1401
    %v1738 = vpack.c.b16 %v1416, %v1409
    %v1739 = vpack.c.b16 %v1417, %v1410
    %v1740 = vpack.c.b16 %v1418, %v1411
    %v1741 = vpack.c.b16 %v1419, %v1412
    %v1742 = vpack.c.b16 %v1420, %v1413
    %v1743 = vpack.c.b16 %v1421, %v1414
    %v1744 = vpack.c.b16 %v1422, %v1415
    %v1745 = vpack.c.b16 %v1430, %v1423
    %v1746 = vpack.c.b16 %v1431, %v1424
    %v1747 = vpack.c.b16 %v1432, %v1425
    %v1748 = vpack.c.b16 %v1433, %v1426
    %v1749 = vpack.c.b16 %v1434, %v1427
    %v1750 = vpack.c.b16 %v1435, %v1428
    %v1751 = vpack.c.b16 %v1436, %v1429
    %v1752 = vpack.c.b16 %v1444, %v1437
    %v1753 = vpack.c.b16 %v1445, %v1438
    %v1754 = vpack.c.b16 %v1446, %v1439
    %v1755 = vpack.c.b16 %v1447, %v1440
    %v1756 = vpack.c.b16 %v1448, %v1441
    %v1757 = vpack.c.b16 %v1449, %v1442
    %v1758 = vpack.c.b16 %v1450, %v1443
    %v1759 = vpack.c.b16 %v1458, %v1451
    %v1760 = vpack.c.b16 %v1459, %v1452
    %v1761 = vpack.c.b16 %v1460, %v1453
    %v1762 = vpack.c.b16 %v1461, %v1454
    %v1763 = vpack.c.b16 %v1462, %v1455
    %v1764 = vpack.c.b16 %v1463, %v1456
    %v1765 = vpack.c.b16 %v1464, %v1457
    %v1766 = vpack.c.b16 %v1472, %v1465
    %v1767 = vpack.c.b16 %v1473, %v1466
    %v1768 = vpack.c.b16 %v1474, %v1467
    %v1769 = vpack.c.b16 %v1475, %v1468
    %v1770 = vpack.c.b16 %v1476, %v1469
    %v1771 = vpack.c.b16 %v1477, %v1470
    %v1772 = vpack.c.b16 %v1478, %v1471
    %v1773 = vpack.c.b16 %v1486, %v1479
    %v1774 = vpack.c.b16 %v1487, %v1480
    %v1775 = vpack.c.b16 %v1488, %v1481
    %v1776 = vpack.c.b16 %v1489, %v1482
    %v1777 = vpack.c.b16 %v1490, %v1483
    %v1778 = vpack.c.b16 %v1491, %v1484
    %v1779 = vpack.c.b16 %v1492, %v1485
    %v1780 = vpack.c.b16 %v1500, %v1493
    %v1781 = vpack.c.b16 %v1501, %v1494
    %v1782 = vpack.c.b16 %v1502, %v1495
    %v1783 = vpack.c.b16 %v1503, %v1496
    %v1784 = vpack.c.b16 %v1504, %v1497
    %v1785 = vpack.c.b16 %v1505, %v1498
    %v1786 = vpack.c.b16 %v1506, %v1499
    %v1787 = vpack.c.b16 %v1514, %v1507
    %v1788 = vpack.c.b16 %v1515, %v1508
    %v1789 = vpack.c.b16 %v1516, %v1509
    %v1790 = vpack.c.b16 %v1517, %v1510
    %v1791 = vpack.c.b16 %v1518, %v1511
    %v1792 = vpack.c.b16 %v1519, %v1512
    %v1793 = vpack.c.b16 %v1520, %v1513
    %v1794 = vpack.c.b16 %v1528, %v1521
    %v1795 = vpack.c.b16 %v1529, %v1522
    %v1796 = vpack.c.b16 %v1530, %v1523
    %v1797 = vpack.c.b16 %v1531, %v1524
    %v1798 = vpack.c.b16 %v1532, %v1525
    %v1799 = vpack.c.b16 %v1533, %v1526
    %v1800 = vpack.c.b16 %v1534, %v1527
    %v1801 = vpack.c.b16 %v1542, %v1535
    %v1802 = vpack.c.b16 %v1543, %v1536
    %v1803 = vpack.c.b16 %v1544, %v1537
    %v1804 = vpack.c.b16 %v1545, %v1538
    %v1805 = vpack.c.b16 %v1546, %v1539
    %v1806 = vpack.c.b16 %v1547, %v1540
    %v1807 = vpack.c.b16 %v1548, %v1541
    %v1808 = vpack.c.b16 %v1556, %v1549
    %v1809 = vpack.c.b16 %v1557, %v1550
    %v1810 = vpack.c.b16 %v1558, %v1551
    %v1811 = vpack.c.b16 %v1559, %v1552
    %v1812 = vpack.c.b16 %v1560, %v1553
    %v1813 = vpack.c.b16 %v1561, %v1554
    %v1814 = vpack.c.b16 %v1562, %v1555
    %v1815 = vpack.c.b16 %v1570, %v1563
    %v1816 = vpack.c.b16 %v1571, %v1564
    %v1817 = vpack.c.b16 %v1572, %v1565
    %v1818 = vpack.c.b16 %v1573, %v1566
    %v1819 = vpack.c.b16 %v1574, %v1567
    %v1820 = vpack.c.b16 %v1575, %v1568
    %v1821 = vpack.c.b16 %v1576, %v1569
    %v1822 = vpack.c.b16 %v1584, %v1577
    %v1823 = vpack.c.b16 %v1585, %v1578
    %v1824 = vpack.c.b16 %v1586, %v1579
    %v1825 = vpack.c.b16 %v1587, %v1580
    %v1826 = vpack.c.b16 %v1588, %v1581
    %v1827 = vpack.c.b16 %v1589, %v1582
    %v1828 = vpack.c.b16 %v1590, %v1583
    %v1829 = vpack.c.b16 %v1598, %v1591
    %v1830 = vpack.c.b16 %v1599, %v1592
    %v1831 = vpack.c.b16 %v1600, %v1593
    %v1832 = vpack.c.b16 %v1601, %v1594
    %v1833 = vpack.c.b16 %v1602, %v1595
    %v1834 = vpack.c.b16 %v1603, %v1596
    %v1835 = vpack.c.b16 %v1604, %v1597
    %v1836 = vpack.c.b16 %v1612, %v1605
    %v1837 = vpack.c.b16 %v1613, %v1606
    %v1838 = vpack.c.b16 %v1614, %v1607
    %v1839 = vpack.c.b16 %v1615, %v1608
    %v1840 = vpack.c.b16 %v1616, %v1609
    %v1841 = vpack.c.b16 %v1617, %v1610
    %v1842 = vpack.c.b16 %v1618, %v1611
    %2067 = vmatprep.subr.bf16.mxu0 %v1669
    %2068 = vmatpush1.bf16.msra.mxu0 %v1668
    %2069 = vmatprep.subr.bf16.mxu0 %v1662
    %2070 = vmatpush1.bf16.msra.mxu0 %v1661
    %2071 = vmatprep.subr.bf16.mxu0 %v1655
    %2072 = vmatpush1.bf16.msra.mxu0 %v1654
    %2073 = vmatprep.subr.bf16.mxu0 %v1648
    %2074 = vmatpush1.bf16.msra.mxu0 %v1647
    %2075 = vmatprep.subr.bf16.mxu0 %v1641
    %2076 = vmatpush1.bf16.msra.mxu0 %v1640
    %2077 = vmatprep.subr.bf16.mxu0 %v1634
    %2078 = vmatpush1.bf16.msra.mxu0 %v1633
    %2079 = vmatprep.subr.bf16.mxu0 %v1627
    %2080 = vmatpush1.bf16.msra.mxu0 %v1626
    %2081 = vmatprep.subr.bf16.mxu0 %v1620
    %2082 = vmatpush1.bf16.msra.mxu0 %v1619
    %2083 = vmatprep.subr.bf16.mxu0 %v1725
    %2084 = vmatpush2.bf16.msra.mxu0 %v1724
    %2085 = vmatprep.subr.bf16.mxu0 %v1718
    %2086 = vmatpush2.bf16.msra.mxu0 %v1717
    %2087 = vmatprep.subr.bf16.mxu0 %v1711
    %2088 = vmatpush2.bf16.msra.mxu0 %v1710
    %2089 = vmatprep.subr.bf16.mxu0 %v1704
    %2090 = vmatpush2.bf16.msra.mxu0 %v1703
    %2091 = vmatprep.subr.bf16.mxu0 %v1697
    %2092 = vmatpush2.bf16.msra.mxu0 %v1696
    %2093 = vmatprep.subr.bf16.mxu0 %v1690
    %2094 = vmatpush2.bf16.msra.mxu0 %v1689
    %2095 = vmatprep.subr.bf16.mxu0 %v1683
    %2096 = vmatpush2.bf16.msra.mxu0 %v1682
    %2097 = vmatprep.subr.bf16.mxu0 %v1676
    %2098 = vmatpush2.bf16.msra.mxu0 %v1675
    %2099 = vmatprep.mubr.bf16.mxu0 %v619
    %2100 = vmatmul.mubr.bf16.gmra.mxu0 %v618
    %v2101 = vpop.f32.mrf.mxu0
    %v2102 = vadd.f32 %v883, %v2101
    %v2103 = vpop.f32.mrf.mxu0
    %v2104 = vadd.f32 %v887, %v2103
    %v2105 = vpop.f32.mrf.mxu0
    %v2106 = vpop.f32.mrf.mxu0
    %2107 = vdwg.mxu0
    %2108 = vmatprep.subr.bf16.mxu0 %v1781
    %2109 = vmatpush1.bf16.msra.mxu0 %v1780
    %2110 = vmatprep.subr.bf16.mxu0 %v1774
    %2111 = vmatpush1.bf16.msra.mxu0 %v1773
    %2112 = vmatprep.subr.bf16.mxu0 %v1767
    %2113 = vmatpush1.bf16.msra.mxu0 %v1766
    %2114 = vmatprep.subr.bf16.mxu0 %v1760
    %2115 = vmatpush1.bf16.msra.mxu0 %v1759
    %2116 = vmatprep.subr.bf16.mxu0 %v1753
    %2117 = vmatpush1.bf16.msra.mxu0 %v1752
    %2118 = vmatprep.subr.bf16.mxu0 %v1746
    %2119 = vmatpush1.bf16.msra.mxu0 %v1745
    %2120 = vmatprep.subr.bf16.mxu0 %v1739
    %2121 = vmatpush1.bf16.msra.mxu0 %v1738
    %2122 = vmatprep.subr.bf16.mxu0 %v1732
    %2123 = vmatpush1.bf16.msra.mxu0 %v1731
    %2124 = vmatprep.subr.bf16.mxu0 %v1837
    %2125 = vmatpush2.bf16.msra.mxu0 %v1836
    %2126 = vmatprep.subr.bf16.mxu0 %v1830
    %2127 = vmatpush2.bf16.msra.mxu0 %v1829
    %2128 = vmatprep.subr.bf16.mxu0 %v1823
    %2129 = vmatpush2.bf16.msra.mxu0 %v1822
    %2130 = vmatprep.subr.bf16.mxu0 %v1816
    %2131 = vmatpush2.bf16.msra.mxu0 %v1815
    %2132 = vmatprep.subr.bf16.mxu0 %v1809
    %2133 = vmatpush2.bf16.msra.mxu0 %v1808
    %2134 = vmatprep.subr.bf16.mxu0 %v1802
    %2135 = vmatpush2.bf16.msra.mxu0 %v1801
    %2136 = vmatprep.subr.bf16.mxu0 %v1795
    %2137 = vmatpush2.bf16.msra.mxu0 %v1794
    %2138 = vmatprep.subr.bf16.mxu0 %v1788
    %2139 = vmatpush2.bf16.msra.mxu0 %v1787
    %2140 = vmatprep.mubr.bf16.mxu0 %v621
    %2141 = vmatmul.mubr.bf16.gmra.mxu0 %v620
    %v2142 = vpop.f32.mrf.mxu0
    %v2143 = vadd.f32 %v2102, %v2142
    %v2144 = vpop.f32.mrf.mxu0
    %v2145 = vadd.f32 %v2104, %v2144
    %v2146 = vpop.f32.mrf.mxu0
    %v2147 = vpop.f32.mrf.mxu0
    %2148 = vdwg.mxu0
    %2149 = vmatprep.subr.bf16.mxu0 %v1671
    %2150 = vmatpush1.bf16.msra.mxu0 %v1670
    %2151 = vmatprep.subr.bf16.mxu0 %v1664
    %2152 = vmatpush1.bf16.msra.mxu0 %v1663
    %2153 = vmatprep.subr.bf16.mxu0 %v1657
    %2154 = vmatpush1.bf16.msra.mxu0 %v1656
    %2155 = vmatprep.subr.bf16.mxu0 %v1650
    %2156 = vmatpush1.bf16.msra.mxu0 %v1649
    %2157 = vmatprep.subr.bf16.mxu0 %v1643
    %2158 = vmatpush1.bf16.msra.mxu0 %v1642
    %2159 = vmatprep.subr.bf16.mxu0 %v1636
    %2160 = vmatpush1.bf16.msra.mxu0 %v1635
    %2161 = vmatprep.subr.bf16.mxu0 %v1629
    %2162 = vmatpush1.bf16.msra.mxu0 %v1628
    %2163 = vmatprep.subr.bf16.mxu0 %v1622
    %2164 = vmatpush1.bf16.msra.mxu0 %v1621
    %2165 = vmatprep.subr.bf16.mxu0 %v1727
    %2166 = vmatpush2.bf16.msra.mxu0 %v1726
    %2167 = vmatprep.subr.bf16.mxu0 %v1720
    %2168 = vmatpush2.bf16.msra.mxu0 %v1719
    %2169 = vmatprep.subr.bf16.mxu0 %v1713
    %2170 = vmatpush2.bf16.msra.mxu0 %v1712
    %2171 = vmatprep.subr.bf16.mxu0 %v1706
    %2172 = vmatpush2.bf16.msra.mxu0 %v1705
    %2173 = vmatprep.subr.bf16.mxu0 %v1699
    %2174 = vmatpush2.bf16.msra.mxu0 %v1698
    %2175 = vmatprep.subr.bf16.mxu0 %v1692
    %2176 = vmatpush2.bf16.msra.mxu0 %v1691
    %2177 = vmatprep.subr.bf16.mxu0 %v1685
    %2178 = vmatpush2.bf16.msra.mxu0 %v1684
    %2179 = vmatprep.subr.bf16.mxu0 %v1678
    %2180 = vmatpush2.bf16.msra.mxu0 %v1677
    %2181 = vmatprep.mubr.bf16.mxu0 %v619
    %2182 = vmatmul.mubr.bf16.gmra.mxu0 %v618
    %v2183 = vpop.f32.mrf.mxu0
    %v2184 = vadd.f32 %v891, %v2183
    %v2185 = vpop.f32.mrf.mxu0
    %v2186 = vadd.f32 %v895, %v2185
    %v2187 = vpop.f32.mrf.mxu0
    %v2188 = vpop.f32.mrf.mxu0
    %2189 = vdwg.mxu0
    %2190 = vmatprep.subr.bf16.mxu0 %v1783
    %2191 = vmatpush1.bf16.msra.mxu0 %v1782
    %2192 = vmatprep.subr.bf16.mxu0 %v1776
    %2193 = vmatpush1.bf16.msra.mxu0 %v1775
    %2194 = vmatprep.subr.bf16.mxu0 %v1769
    %2195 = vmatpush1.bf16.msra.mxu0 %v1768
    %2196 = vmatprep.subr.bf16.mxu0 %v1762
    %2197 = vmatpush1.bf16.msra.mxu0 %v1761
    %2198 = vmatprep.subr.bf16.mxu0 %v1755
    %2199 = vmatpush1.bf16.msra.mxu0 %v1754
    %2200 = vmatprep.subr.bf16.mxu0 %v1748
    %2201 = vmatpush1.bf16.msra.mxu0 %v1747
    %2202 = vmatprep.subr.bf16.mxu0 %v1741
    %2203 = vmatpush1.bf16.msra.mxu0 %v1740
    %2204 = vmatprep.subr.bf16.mxu0 %v1734
    %2205 = vmatpush1.bf16.msra.mxu0 %v1733
    %2206 = vmatprep.subr.bf16.mxu0 %v1839
    %2207 = vmatpush2.bf16.msra.mxu0 %v1838
    %2208 = vmatprep.subr.bf16.mxu0 %v1832
    %2209 = vmatpush2.bf16.msra.mxu0 %v1831
    %2210 = vmatprep.subr.bf16.mxu0 %v1825
    %2211 = vmatpush2.bf16.msra.mxu0 %v1824
    %2212 = vmatprep.subr.bf16.mxu0 %v1818
    %2213 = vmatpush2.bf16.msra.mxu0 %v1817
    %2214 = vmatprep.subr.bf16.mxu0 %v1811
    %2215 = vmatpush2.bf16.msra.mxu0 %v1810
    %2216 = vmatprep.subr.bf16.mxu0 %v1804
    %2217 = vmatpush2.bf16.msra.mxu0 %v1803
    %2218 = vmatprep.subr.bf16.mxu0 %v1797
    %2219 = vmatpush2.bf16.msra.mxu0 %v1796
    %2220 = vmatprep.subr.bf16.mxu0 %v1790
    %2221 = vmatpush2.bf16.msra.mxu0 %v1789
    %2222 = vmatprep.mubr.bf16.mxu0 %v621
    %2223 = vmatmul.mubr.bf16.gmra.mxu0 %v620
    %v2224 = vpop.f32.mrf.mxu0
    %v2225 = vadd.f32 %v2184, %v2224
    %v2226 = vpop.f32.mrf.mxu0
    %v2227 = vadd.f32 %v2186, %v2226
    %v2228 = vpop.f32.mrf.mxu0
    %v2229 = vpop.f32.mrf.mxu0
    %2230 = vdwg.mxu0
    %2231 = vmatprep.subr.bf16.mxu0 %v1673
    %2232 = vmatpush1.bf16.msra.mxu0 %v1672
    %2233 = vmatprep.subr.bf16.mxu0 %v1666
    %2234 = vmatpush1.bf16.msra.mxu0 %v1665
    %2235 = vmatprep.subr.bf16.mxu0 %v1659
    %2236 = vmatpush1.bf16.msra.mxu0 %v1658
    %2237 = vmatprep.subr.bf16.mxu0 %v1652
    %2238 = vmatpush1.bf16.msra.mxu0 %v1651
    %2239 = vmatprep.subr.bf16.mxu0 %v1645
    %2240 = vmatpush1.bf16.msra.mxu0 %v1644
    %2241 = vmatprep.subr.bf16.mxu0 %v1638
    %2242 = vmatpush1.bf16.msra.mxu0 %v1637
    %2243 = vmatprep.subr.bf16.mxu0 %v1631
    %2244 = vmatpush1.bf16.msra.mxu0 %v1630
    %2245 = vmatprep.subr.bf16.mxu0 %v1624
    %2246 = vmatpush1.bf16.msra.mxu0 %v1623
    %2247 = vmatprep.subr.bf16.mxu0 %v1729
    %2248 = vmatpush2.bf16.msra.mxu0 %v1728
    %2249 = vmatprep.subr.bf16.mxu0 %v1722
    %2250 = vmatpush2.bf16.msra.mxu0 %v1721
    %2251 = vmatprep.subr.bf16.mxu0 %v1715
    %2252 = vmatpush2.bf16.msra.mxu0 %v1714
    %2253 = vmatprep.subr.bf16.mxu0 %v1708
    %2254 = vmatpush2.bf16.msra.mxu0 %v1707
    %2255 = vmatprep.subr.bf16.mxu0 %v1701
    %2256 = vmatpush2.bf16.msra.mxu0 %v1700
    %2257 = vmatprep.subr.bf16.mxu0 %v1694
    %2258 = vmatpush2.bf16.msra.mxu0 %v1693
    %2259 = vmatprep.subr.bf16.mxu0 %v1687
    %2260 = vmatpush2.bf16.msra.mxu0 %v1686
    %2261 = vmatprep.subr.bf16.mxu0 %v1680
    %2262 = vmatpush2.bf16.msra.mxu0 %v1679
    %2263 = vmatprep.mubr.bf16.mxu0 %v619
    %2264 = vmatmul.mubr.bf16.gmra.mxu0 %v618
    %v2265 = vpop.f32.mrf.mxu0
    %v2266 = vadd.f32 %v899, %v2265
    %v2267 = vpop.f32.mrf.mxu0
    %v2268 = vadd.f32 %v903, %v2267
    %v2269 = vpop.f32.mrf.mxu0
    %v2270 = vpop.f32.mrf.mxu0
    %2271 = vdwg.mxu0
    %2272 = vmatprep.subr.bf16.mxu0 %v1785
    %2273 = vmatpush1.bf16.msra.mxu0 %v1784
    %2274 = vmatprep.subr.bf16.mxu0 %v1778
    %2275 = vmatpush1.bf16.msra.mxu0 %v1777
    %2276 = vmatprep.subr.bf16.mxu0 %v1771
    %2277 = vmatpush1.bf16.msra.mxu0 %v1770
    %2278 = vmatprep.subr.bf16.mxu0 %v1764
    %2279 = vmatpush1.bf16.msra.mxu0 %v1763
    %2280 = vmatprep.subr.bf16.mxu0 %v1757
    %2281 = vmatpush1.bf16.msra.mxu0 %v1756
    %2282 = vmatprep.subr.bf16.mxu0 %v1750
    %2283 = vmatpush1.bf16.msra.mxu0 %v1749
    %2284 = vmatprep.subr.bf16.mxu0 %v1743
    %2285 = vmatpush1.bf16.msra.mxu0 %v1742
    %2286 = vmatprep.subr.bf16.mxu0 %v1736
    %2287 = vmatpush1.bf16.msra.mxu0 %v1735
    %2288 = vmatprep.subr.bf16.mxu0 %v1841
    %2289 = vmatpush2.bf16.msra.mxu0 %v1840
    %2290 = vmatprep.subr.bf16.mxu0 %v1834
    %2291 = vmatpush2.bf16.msra.mxu0 %v1833
    %2292 = vmatprep.subr.bf16.mxu0 %v1827
    %2293 = vmatpush2.bf16.msra.mxu0 %v1826
    %2294 = vmatprep.subr.bf16.mxu0 %v1820
    %2295 = vmatpush2.bf16.msra.mxu0 %v1819
    %2296 = vmatprep.subr.bf16.mxu0 %v1813
    %2297 = vmatpush2.bf16.msra.mxu0 %v1812
    %2298 = vmatprep.subr.bf16.mxu0 %v1806
    %2299 = vmatpush2.bf16.msra.mxu0 %v1805
    %2300 = vmatprep.subr.bf16.mxu0 %v1799
    %2301 = vmatpush2.bf16.msra.mxu0 %v1798
    %2302 = vmatprep.subr.bf16.mxu0 %v1792
    %2303 = vmatpush2.bf16.msra.mxu0 %v1791
    %2304 = vmatprep.mubr.bf16.mxu0 %v621
    %2305 = vmatmul.mubr.bf16.gmra.mxu0 %v620
    %v2306 = vpop.f32.mrf.mxu0
    %v2307 = vadd.f32 %v2266, %v2306
    %v2308 = vpop.f32.mrf.mxu0
    %v2309 = vadd.f32 %v2268, %v2308
    %v2310 = vpop.f32.mrf.mxu0
    %v2311 = vpop.f32.mrf.mxu0
    %2312 = vdwg.mxu0
    %2313 = vmatprep.subr.bf16.mxu0 0
    %2314 = vmatpush1.bf16.msra.mxu0 %v1674
    %2315 = vmatprep.subr.bf16.mxu0 0
    %2316 = vmatpush1.bf16.msra.mxu0 %v1667
    %2317 = vmatprep.subr.bf16.mxu0 0
    %2318 = vmatpush1.bf16.msra.mxu0 %v1660
    %2319 = vmatprep.subr.bf16.mxu0 0
    %2320 = vmatpush1.bf16.msra.mxu0 %v1653
    %2321 = vmatprep.subr.bf16.mxu0 0
    %2322 = vmatpush1.bf16.msra.mxu0 %v1646
    %2323 = vmatprep.subr.bf16.mxu0 0
    %2324 = vmatpush1.bf16.msra.mxu0 %v1639
    %2325 = vmatprep.subr.bf16.mxu0 0
    %2326 = vmatpush1.bf16.msra.mxu0 %v1632
    %2327 = vmatprep.subr.bf16.mxu0 0
    %2328 = vmatpush1.bf16.msra.mxu0 %v1625
    %2329 = vmatprep.subr.bf16.mxu0 0
    %2330 = vmatpush2.bf16.msra.mxu0 %v1730
    %2331 = vmatprep.subr.bf16.mxu0 0
    %2332 = vmatpush2.bf16.msra.mxu0 %v1723
    %2333 = vmatprep.subr.bf16.mxu0 0
    %2334 = vmatpush2.bf16.msra.mxu0 %v1716
    %2335 = vmatprep.subr.bf16.mxu0 0
    %2336 = vmatpush2.bf16.msra.mxu0 %v1709
    %2337 = vmatprep.subr.bf16.mxu0 0
    %2338 = vmatpush2.bf16.msra.mxu0 %v1702
    %2339 = vmatprep.subr.bf16.mxu0 0
    %2340 = vmatpush2.bf16.msra.mxu0 %v1695
    %2341 = vmatprep.subr.bf16.mxu0 0
    %2342 = vmatpush2.bf16.msra.mxu0 %v1688
    %2343 = vmatprep.subr.bf16.mxu0 0
    %2344 = vmatpush2.bf16.msra.mxu0 %v1681
    %2345 = vmatprep.mubr.bf16.mxu0 %v619
    %2346 = vmatmul.mubr.bf16.gmra.mxu0 %v618
    %v2347 = vpop.f32.mrf.mxu0
    %v2348 = vadd.f32 %v907, %v2347
    %v2349 = vpop.f32.mrf.mxu0
    %v2350 = vpop.f32.mrf.mxu0
    %v2351 = vpop.f32.mrf.mxu0
    %2352 = vdwg.mxu0
    %2353 = vmatprep.subr.bf16.mxu0 0
    %2354 = vmatpush1.bf16.msra.mxu0 %v1786
    %2355 = vmatprep.subr.bf16.mxu0 0
    %2356 = vmatpush1.bf16.msra.mxu0 %v1779
    %2357 = vmatprep.subr.bf16.mxu0 0
    %2358 = vmatpush1.bf16.msra.mxu0 %v1772
    %2359 = vmatprep.subr.bf16.mxu0 0
    %2360 = vmatpush1.bf16.msra.mxu0 %v1765
    %2361 = vmatprep.subr.bf16.mxu0 0
    %2362 = vmatpush1.bf16.msra.mxu0 %v1758
    %2363 = vmatprep.subr.bf16.mxu0 0
    %2364 = vmatpush1.bf16.msra.mxu0 %v1751
    %2365 = vmatprep.subr.bf16.mxu0 0
    %2366 = vmatpush1.bf16.msra.mxu0 %v1744
    %2367 = vmatprep.subr.bf16.mxu0 0
    %2368 = vmatpush1.bf16.msra.mxu0 %v1737
    %2369 = vmatprep.subr.bf16.mxu0 0
    %2370 = vmatpush2.bf16.msra.mxu0 %v1842
    %2371 = vmatprep.subr.bf16.mxu0 0
    %2372 = vmatpush2.bf16.msra.mxu0 %v1835
    %2373 = vmatprep.subr.bf16.mxu0 0
    %2374 = vmatpush2.bf16.msra.mxu0 %v1828
    %2375 = vmatprep.subr.bf16.mxu0 0
    %2376 = vmatpush2.bf16.msra.mxu0 %v1821
    %2377 = vmatprep.subr.bf16.mxu0 0
    %2378 = vmatpush2.bf16.msra.mxu0 %v1814
    %2379 = vmatprep.subr.bf16.mxu0 0
    %2380 = vmatpush2.bf16.msra.mxu0 %v1807
    %2381 = vmatprep.subr.bf16.mxu0 0
    %2382 = vmatpush2.bf16.msra.mxu0 %v1800
    %2383 = vmatprep.subr.bf16.mxu0 0
    %2384 = vmatpush2.bf16.msra.mxu0 %v1793
    %2385 = vmatprep.mubr.bf16.mxu0 %v621
    %2386 = vmatmul.mubr.bf16.gmra.mxu0 %v620
    %v2387 = vpop.f32.mrf.mxu0
    %v2388 = vadd.f32 %v2348, %v2387
    %v2389 = vpop.f32.mrf.mxu0
    %v2390 = vpop.f32.mrf.mxu0
    %v2391 = vpop.f32.mrf.mxu0
    %2392 = vdwg.mxu0
    %2393 = vst [vmem:[#allocation8] sm:$0xff] %v2143
    %2394 = vst [vmem:[#allocation8 + $0x8] sm:$0xff] %v2145
    %2395 = vst [vmem:[#allocation8 + $0x10] sm:$0xff] %v2225
    %2396 = vst [vmem:[#allocation8 + $0x18] sm:$0xff] %v2227
    %2397 = vst [vmem:[#allocation8 + $0x20] sm:$0xff] %v2307
    %2398 = vst [vmem:[#allocation8 + $0x28] sm:$0xff] %v2309
    %2399 = vst [vmem:[#allocation8 + $0x30] sm:$0xff] %v2388
    // Predicated region
    $region42: #{tpu_custom_call.1} parent=1 // pred_check
      _
    $region43: #{tpu_custom_call.1} parent=1 // pred_check_branch
      %2401 = sbr.rel (0) target = $region45
    $region44: #{tpu_custom_call.1} parent=1 // pred_region
      %s2403 = ssub.s32 896, 896
      %2404 = vsyncadd [#allocation4], %s2403
      %s2406 = sshll.u32 [#allocation8], 4
      %s2407 = int_to_ptr.vmem [resolvable:$true] %s2406
      %2409 = dma.vmem_to_hbm [thread:$0]  %s2407, 896, %s7, [#allocation4]
    $region45: #{tpu_custom_call.1} parent=1 // pred_fallthru
      _
    // Predicated region
    $region46: #{tpu_custom_call.1} parent=1 // pred_check
      _
    $region47: #{tpu_custom_call.1} parent=1 // pred_check_branch
      %2411 = sbr.rel (0) target = $region49
    $region48: #{tpu_custom_call.1} parent=1 // pred_region
      %2412 = dma.done [#allocation4], 896
    $region49: #{tpu_custom_call.1} parent=1 // pred_fallthru
      _
    %2413 = vsyncpa [#allocation3], 1
    %2414 = vsyncpa [#allocation6], 1
    %2415 = vsyncpa [#allocation4], 1

</llo_original>
